<compile_context>
chip_gen: v7x
topology: tpu7x:2x2x1
jax: 0.10.0
libtpu: 0.0.40
codegen_flags: <defaults>
</compile_context>

<pallas_src>
import functools
import math

import jax
import jax.numpy as jnp
from jax import lax
from jax.experimental import pallas as pl
from jax.experimental.pallas import tpu as pltpu


def _rel_attn_kernel(bias_tab_ref, q_ref, k_ref, v_ref, o_ref, *, max_rel):
    # bias_tab_ref: (2*max_rel+1,) f32 in SMEM
    # q_ref/k_ref/v_ref: (1, H, L, D) VMEM blocks; o_ref: (1, L, H*D) VMEM block
    _, H, L, D = q_ref.shape

    q = q_ref[0]  # (H, L, D) — native dtype, fed straight to the MXU
    k = k_ref[0]
    v = v_ref[0]

    scale = 1.0 / math.sqrt(D)

    # scores[h] = q[h] @ k[h]^T : contract D (last dim of both), batch over H.
    scores = lax.dot_general(
        q, k,
        dimension_numbers=(((2,), (2,)), ((0,), (0,))),
        preferred_element_type=jnp.float32,
    )  # (H, L, L) f32

    # Relative-position (Toeplitz) bias built in-kernel: iota indices + an
    # unrolled compare/select gather from the tiny SMEM table.
    row = lax.broadcasted_iota(jnp.int32, (L, L), 0)
    col = lax.broadcasted_iota(jnp.int32, (L, L), 1)
    idx = jnp.clip(col - row, -max_rel, max_rel) + max_rel  # in [0, 2*max_rel]
    bias = jnp.zeros((L, L), jnp.float32)
    for j in range(2 * max_rel + 1):
        bias = jnp.where(idx == j, bias_tab_ref[j], bias)

    scores = scores * scale + bias[None, :, :]

    # Numerically stable softmax, kept in f32 (VPU/EUP).
    m = jnp.max(scores, axis=-1, keepdims=True)      # (H, L, 1)
    e = jnp.exp(scores - m)                           # (H, L, L)
    denom = jnp.sum(e, axis=-1, keepdims=True)        # (H, L, 1)
    inv = pl.reciprocal(denom, approx=True)           # EUP slot (nearly free)
    inv = inv * (2.0 - denom * inv)                   # one Newton step -> ~f32

    # PV matmul on un-normalized probs (cast to the MXU input dtype), then
    # normalize the (H, L, D) output instead of the (H, L, L) prob matrix.
    out = lax.dot_general(
        e.astype(v.dtype), v,
        dimension_numbers=(((2,), (1,)), ((0,), (0,))),
        preferred_element_type=jnp.float32,
    )  # (H, L, D) f32
    out = out * inv

    # Pack heads along lanes -> (L, H*D): one unmasked, lane-dense store.
    packed = jnp.concatenate([out[h] for h in range(H)], axis=-1)  # (L, H*D)
    o_ref[0] = packed.astype(o_ref.dtype)


def relative_attention(q, k, v, relative_bias, max_relative_position):
    """q, k, v: (B, H, L, D). relative_bias: (2*max_relative_position + 1,)."""
    B, H, L, D = q.shape
    bias_tab = relative_bias.astype(jnp.float32)

    kernel = functools.partial(_rel_attn_kernel, max_rel=max_relative_position)

    qkv_spec = pl.BlockSpec((1, H, L, D), lambda b: (b, 0, 0, 0))
    out_spec = pl.BlockSpec((1, L, H * D), lambda b: (b, 0, 0))
    tab_spec = pl.BlockSpec(memory_space=pltpu.MemorySpace.SMEM)

    packed = pl.pallas_call(
        kernel,
        out_shape=jax.ShapeDtypeStruct((B, L, H * D), q.dtype),
        grid_spec=pltpu.PrefetchScalarGridSpec(
            num_scalar_prefetch=0,
            grid=(B,),
            in_specs=[tab_spec, qkv_spec, qkv_spec, qkv_spec],
            out_specs=out_spec,
        ),
        compiler_params=pltpu.CompilerParams(
            dimension_semantics=("parallel",),
            vmem_limit_bytes=32 * 1024 * 1024,
        ),
    )(bias_tab, q, k, v)

    # (B, L, H*D) -> (B, H, L, D): cheap XLA reshape/transpose outside the kernel.
    return packed.reshape(B, L, H, D).transpose(0, 2, 1, 3)


def relative_attention_ref(q, k, v, relative_bias, max_relative_position):
    """Pure-JAX reference matching the PyTorch forward (mask=None)."""
    B, H, L, D = q.shape
    scale = math.sqrt(D)
    scores = jnp.einsum("bhld,bhmd->bhlm", q, k).astype(jnp.float32) / scale
    positions = jnp.arange(L)
    rel = positions[None, :] - positions[:, None]
    rel = jnp.clip(rel, -max_relative_position, max_relative_position)
    bias = relative_bias[rel + max_relative_position]
    scores = scores + bias[None, None]
    attn = jax.nn.softmax(scores, axis=-1)
    return jnp.einsum("bhlm,bhmd->bhld", attn, v.astype(jnp.float32)).astype(q.dtype)


if __name__ == "__main__":
    B, H, L, D = 2, 4, 16, 32
    max_relative_position = 8

    key = jax.random.PRNGKey(0)
    kq, kk, kv = jax.random.split(key, 3)
    q = jax.random.normal(kq, (B, H, L, D), dtype=jnp.float32)
    k = jax.random.normal(kk, (B, H, L, D), dtype=jnp.float32)
    v = jax.random.normal(kv, (B, H, L, D), dtype=jnp.float32)

    # nn.Parameter(torch.zeros(2*max_rel+1)) — deterministic init; use a small
    # nonzero ramp so the bias path is actually exercised.
    relative_bias = jnp.linspace(
        -0.5, 0.5, 2 * max_relative_position + 1, dtype=jnp.float32
    )

    out = relative_attention(q, k, v, relative_bias, max_relative_position)
    out = jax.block_until_ready(out)

    ref = relative_attention_ref(q, k, v, relative_bias, max_relative_position)
    assert out.shape == (B, H, L, D)
    assert jnp.allclose(out, ref, atol=1e-4, rtol=1e-4), "mismatch vs reference"

    print("KERNEL_OK")
</pallas_src>

<mosaic_0001>
module attributes {stable_mosaic.version = 11 : i64} {
  func.func @_rel_attn_kernel(%arg0: i32, %arg1: memref<17xf32, #tpu.memory_space<smem>>, %arg2: memref<1x4x16x32xf32, #tpu.memory_space<vmem>>, %arg3: memref<1x4x16x32xf32, #tpu.memory_space<vmem>>, %arg4: memref<1x4x16x32xf32, #tpu.memory_space<vmem>>, %arg5: memref<1x16x128xf32, #tpu.memory_space<vmem>>) attributes {dimension_semantics = [#tpu.dimension_semantics<parallel>], iteration_bounds = array<i64: 2>, scalar_prefetch = 0 : i64, scratch_operands = 0 : i64, tpu.core_type = #tpu.core_type<tc>, window_params = [{transform_indices = @transform_0, window_bounds = array<i64: 17>}, {transform_indices = @transform_1, window_bounds = array<i64: 1, 4, 16, 32>}, {transform_indices = @transform_2, window_bounds = array<i64: 1, 4, 16, 32>}, {transform_indices = @transform_3, window_bounds = array<i64: 1, 4, 16, 32>}, {transform_indices = @transform_4, window_bounds = array<i64: 1, 16, 128>}]} {
    %c0 = arith.constant 0 : index
    %c0_0 = arith.constant 0 : index
    %c0_1 = arith.constant 0 : index
    %c0_2 = arith.constant 0 : index
    %0 = vector.load %arg2[%c0, %c0_0, %c0_1, %c0_2] : memref<1x4x16x32xf32, #tpu.memory_space<vmem>>, vector<1x4x16x32xf32>
    %1 = vector.shape_cast %0 : vector<1x4x16x32xf32> to vector<4x16x32xf32>
    %c0_3 = arith.constant 0 : index
    %c0_4 = arith.constant 0 : index
    %c0_5 = arith.constant 0 : index
    %c0_6 = arith.constant 0 : index
    %2 = vector.load %arg3[%c0_3, %c0_4, %c0_5, %c0_6] : memref<1x4x16x32xf32, #tpu.memory_space<vmem>>, vector<1x4x16x32xf32>
    %3 = vector.shape_cast %2 : vector<1x4x16x32xf32> to vector<4x16x32xf32>
    %c0_7 = arith.constant 0 : index
    %c0_8 = arith.constant 0 : index
    %c0_9 = arith.constant 0 : index
    %c0_10 = arith.constant 0 : index
    %4 = vector.load %arg4[%c0_7, %c0_8, %c0_9, %c0_10] : memref<1x4x16x32xf32, #tpu.memory_space<vmem>>, vector<1x4x16x32xf32>
    %5 = vector.shape_cast %4 : vector<1x4x16x32xf32> to vector<4x16x32xf32>
    %cst = arith.constant dense<0.000000e+00> : vector<4x16x16xf32>
    %6 = tpu.matmul %1, %3, %cst {dimension_numbers = #tpu.dot_dimension_numbers<[2], [2], [1], [1], [0, 0, 0, 1, 1, 1], [0], [0]>} : vector<4x16x32xf32>, vector<4x16x32xf32>, vector<4x16x16xf32> -> vector<4x16x16xf32>
    %7 = tpu.iota {dimensions = array<i32: 0>} : vector<16x16xi32>
    %8 = tpu.iota {dimensions = array<i32: 1>} : vector<16x16xi32>
    %9 = arith.subi %8, %7 : vector<16x16xi32>
    %c-8_i32 = arith.constant -8 : i32
    %c8_i32 = arith.constant 8 : i32
    %10 = vector.broadcast %c-8_i32 : i32 to vector<16x16xi32>
    %11 = arith.maxsi %10, %9 : vector<16x16xi32>
    %12 = vector.broadcast %c8_i32 : i32 to vector<16x16xi32>
    %13 = arith.minsi %12, %11 : vector<16x16xi32>
    %c8_i32_11 = arith.constant 8 : i32
    %14 = vector.broadcast %c8_i32_11 : i32 to vector<16x16xi32>
    %15 = arith.addi %13, %14 : vector<16x16xi32>
    %cst_12 = arith.constant 0.000000e+00 : f32
    %16 = vector.broadcast %cst_12 : f32 to vector<16x16xf32>
    %c0_i32 = arith.constant 0 : i32
    %17 = vector.broadcast %c0_i32 : i32 to vector<16x16xi32>
    %18 = arith.cmpi eq, %15, %17 : vector<16x16xi32>
    %c0_13 = arith.constant 0 : index
    %19 = memref.load %arg1[%c0_13] : memref<17xf32, #tpu.memory_space<smem>>
    %20 = vector.broadcast %19 : f32 to vector<16x16xf32>
    %21 = arith.select %18, %20, %16 : vector<16x16xi1>, vector<16x16xf32>
    %c1_i32 = arith.constant 1 : i32
    %22 = vector.broadcast %c1_i32 : i32 to vector<16x16xi32>
    %23 = arith.cmpi eq, %15, %22 : vector<16x16xi32>
    %c1 = arith.constant 1 : index
    %24 = memref.load %arg1[%c1] : memref<17xf32, #tpu.memory_space<smem>>
    %25 = vector.broadcast %24 : f32 to vector<16x16xf32>
    %26 = arith.select %23, %25, %21 : vector<16x16xi1>, vector<16x16xf32>
    %c2_i32 = arith.constant 2 : i32
    %27 = vector.broadcast %c2_i32 : i32 to vector<16x16xi32>
    %28 = arith.cmpi eq, %15, %27 : vector<16x16xi32>
    %c2 = arith.constant 2 : index
    %29 = memref.load %arg1[%c2] : memref<17xf32, #tpu.memory_space<smem>>
    %30 = vector.broadcast %29 : f32 to vector<16x16xf32>
    %31 = arith.select %28, %30, %26 : vector<16x16xi1>, vector<16x16xf32>
    %c3_i32 = arith.constant 3 : i32
    %32 = vector.broadcast %c3_i32 : i32 to vector<16x16xi32>
    %33 = arith.cmpi eq, %15, %32 : vector<16x16xi32>
    %c3 = arith.constant 3 : index
    %34 = memref.load %arg1[%c3] : memref<17xf32, #tpu.memory_space<smem>>
    %35 = vector.broadcast %34 : f32 to vector<16x16xf32>
    %36 = arith.select %33, %35, %31 : vector<16x16xi1>, vector<16x16xf32>
    %c4_i32 = arith.constant 4 : i32
    %37 = vector.broadcast %c4_i32 : i32 to vector<16x16xi32>
    %38 = arith.cmpi eq, %15, %37 : vector<16x16xi32>
    %c4 = arith.constant 4 : index
    %39 = memref.load %arg1[%c4] : memref<17xf32, #tpu.memory_space<smem>>
    %40 = vector.broadcast %39 : f32 to vector<16x16xf32>
    %41 = arith.select %38, %40, %36 : vector<16x16xi1>, vector<16x16xf32>
    %c5_i32 = arith.constant 5 : i32
    %42 = vector.broadcast %c5_i32 : i32 to vector<16x16xi32>
    %43 = arith.cmpi eq, %15, %42 : vector<16x16xi32>
    %c5 = arith.constant 5 : index
    %44 = memref.load %arg1[%c5] : memref<17xf32, #tpu.memory_space<smem>>
    %45 = vector.broadcast %44 : f32 to vector<16x16xf32>
    %46 = arith.select %43, %45, %41 : vector<16x16xi1>, vector<16x16xf32>
    %c6_i32 = arith.constant 6 : i32
    %47 = vector.broadcast %c6_i32 : i32 to vector<16x16xi32>
    %48 = arith.cmpi eq, %15, %47 : vector<16x16xi32>
    %c6 = arith.constant 6 : index
    %49 = memref.load %arg1[%c6] : memref<17xf32, #tpu.memory_space<smem>>
    %50 = vector.broadcast %49 : f32 to vector<16x16xf32>
    %51 = arith.select %48, %50, %46 : vector<16x16xi1>, vector<16x16xf32>
    %c7_i32 = arith.constant 7 : i32
    %52 = vector.broadcast %c7_i32 : i32 to vector<16x16xi32>
    %53 = arith.cmpi eq, %15, %52 : vector<16x16xi32>
    %c7 = arith.constant 7 : index
    %54 = memref.load %arg1[%c7] : memref<17xf32, #tpu.memory_space<smem>>
    %55 = vector.broadcast %54 : f32 to vector<16x16xf32>
    %56 = arith.select %53, %55, %51 : vector<16x16xi1>, vector<16x16xf32>
    %c8_i32_14 = arith.constant 8 : i32
    %57 = vector.broadcast %c8_i32_14 : i32 to vector<16x16xi32>
    %58 = arith.cmpi eq, %15, %57 : vector<16x16xi32>
    %c8 = arith.constant 8 : index
    %59 = memref.load %arg1[%c8] : memref<17xf32, #tpu.memory_space<smem>>
    %60 = vector.broadcast %59 : f32 to vector<16x16xf32>
    %61 = arith.select %58, %60, %56 : vector<16x16xi1>, vector<16x16xf32>
    %c9_i32 = arith.constant 9 : i32
    %62 = vector.broadcast %c9_i32 : i32 to vector<16x16xi32>
    %63 = arith.cmpi eq, %15, %62 : vector<16x16xi32>
    %c9 = arith.constant 9 : index
    %64 = memref.load %arg1[%c9] : memref<17xf32, #tpu.memory_space<smem>>
    %65 = vector.broadcast %64 : f32 to vector<16x16xf32>
    %66 = arith.select %63, %65, %61 : vector<16x16xi1>, vector<16x16xf32>
    %c10_i32 = arith.constant 10 : i32
    %67 = vector.broadcast %c10_i32 : i32 to vector<16x16xi32>
    %68 = arith.cmpi eq, %15, %67 : vector<16x16xi32>
    %c10 = arith.constant 10 : index
    %69 = memref.load %arg1[%c10] : memref<17xf32, #tpu.memory_space<smem>>
    %70 = vector.broadcast %69 : f32 to vector<16x16xf32>
    %71 = arith.select %68, %70, %66 : vector<16x16xi1>, vector<16x16xf32>
    %c11_i32 = arith.constant 11 : i32
    %72 = vector.broadcast %c11_i32 : i32 to vector<16x16xi32>
    %73 = arith.cmpi eq, %15, %72 : vector<16x16xi32>
    %c11 = arith.constant 11 : index
    %74 = memref.load %arg1[%c11] : memref<17xf32, #tpu.memory_space<smem>>
    %75 = vector.broadcast %74 : f32 to vector<16x16xf32>
    %76 = arith.select %73, %75, %71 : vector<16x16xi1>, vector<16x16xf32>
    %c12_i32 = arith.constant 12 : i32
    %77 = vector.broadcast %c12_i32 : i32 to vector<16x16xi32>
    %78 = arith.cmpi eq, %15, %77 : vector<16x16xi32>
    %c12 = arith.constant 12 : index
    %79 = memref.load %arg1[%c12] : memref<17xf32, #tpu.memory_space<smem>>
    %80 = vector.broadcast %79 : f32 to vector<16x16xf32>
    %81 = arith.select %78, %80, %76 : vector<16x16xi1>, vector<16x16xf32>
    %c13_i32 = arith.constant 13 : i32
    %82 = vector.broadcast %c13_i32 : i32 to vector<16x16xi32>
    %83 = arith.cmpi eq, %15, %82 : vector<16x16xi32>
    %c13 = arith.constant 13 : index
    %84 = memref.load %arg1[%c13] : memref<17xf32, #tpu.memory_space<smem>>
    %85 = vector.broadcast %84 : f32 to vector<16x16xf32>
    %86 = arith.select %83, %85, %81 : vector<16x16xi1>, vector<16x16xf32>
    %c14_i32 = arith.constant 14 : i32
    %87 = vector.broadcast %c14_i32 : i32 to vector<16x16xi32>
    %88 = arith.cmpi eq, %15, %87 : vector<16x16xi32>
    %c14 = arith.constant 14 : index
    %89 = memref.load %arg1[%c14] : memref<17xf32, #tpu.memory_space<smem>>
    %90 = vector.broadcast %89 : f32 to vector<16x16xf32>
    %91 = arith.select %88, %90, %86 : vector<16x16xi1>, vector<16x16xf32>
    %c15_i32 = arith.constant 15 : i32
    %92 = vector.broadcast %c15_i32 : i32 to vector<16x16xi32>
    %93 = arith.cmpi eq, %15, %92 : vector<16x16xi32>
    %c15 = arith.constant 15 : index
    %94 = memref.load %arg1[%c15] : memref<17xf32, #tpu.memory_space<smem>>
    %95 = vector.broadcast %94 : f32 to vector<16x16xf32>
    %96 = arith.select %93, %95, %91 : vector<16x16xi1>, vector<16x16xf32>
    %c16_i32 = arith.constant 16 : i32
    %97 = vector.broadcast %c16_i32 : i32 to vector<16x16xi32>
    %98 = arith.cmpi eq, %15, %97 : vector<16x16xi32>
    %c16 = arith.constant 16 : index
    %99 = memref.load %arg1[%c16] : memref<17xf32, #tpu.memory_space<smem>>
    %100 = vector.broadcast %99 : f32 to vector<16x16xf32>
    %101 = arith.select %98, %100, %96 : vector<16x16xi1>, vector<16x16xf32>
    %cst_15 = arith.constant 0.176776692 : f32
    %102 = vector.broadcast %cst_15 : f32 to vector<4x16x16xf32>
    %103 = arith.mulf %6, %102 : vector<4x16x16xf32>
    %104 = vector.shape_cast %101 : vector<16x16xf32> to vector<1x16x16xf32>
    %105 = vector.broadcast %104 : vector<1x16x16xf32> to vector<4x16x16xf32>
    %106 = arith.addf %103, %105 : vector<4x16x16xf32>
    %cst_16 = arith.constant dense<0xFF800000> : vector<4x16xf32>
    %107 = vector.multi_reduction <maximumf>, %106, %cst_16 [2] : vector<4x16x16xf32> to vector<4x16xf32>
    %108 = vector.shape_cast %107 : vector<4x16xf32> to vector<4x16x1xf32>
    %109 = vector.broadcast %108 : vector<4x16x1xf32> to vector<4x16x16xf32>
    %110 = arith.subf %106, %109 : vector<4x16x16xf32>
    %111 = math.exp %110 : vector<4x16x16xf32>
    %cst_17 = arith.constant dense<0.000000e+00> : vector<4x16xf32>
    %112 = vector.multi_reduction <add>, %111, %cst_17 [2] : vector<4x16x16xf32> to vector<4x16xf32>
    %113 = vector.shape_cast %112 : vector<4x16xf32> to vector<4x16x1xf32>
    %114 = tpu.reciprocal %113 {approx = true} : vector<4x16x1xf32> -> vector<4x16x1xf32>
    %115 = arith.mulf %113, %114 : vector<4x16x1xf32>
    %cst_18 = arith.constant 2.000000e+00 : f32
    %116 = vector.broadcast %cst_18 : f32 to vector<4x16x1xf32>
    %117 = arith.subf %116, %115 : vector<4x16x1xf32>
    %118 = arith.mulf %114, %117 : vector<4x16x1xf32>
    %cst_19 = arith.constant dense<0.000000e+00> : vector<4x16x32xf32>
    %119 = tpu.matmul %111, %5, %cst_19 {dimension_numbers = #tpu.dot_dimension_numbers<[2], [1], [1], [2], [0, 0, 0, 1, 1, 2], [0], [0]>} : vector<4x16x16xf32>, vector<4x16x32xf32>, vector<4x16x32xf32> -> vector<4x16x32xf32>
    %120 = vector.broadcast %118 : vector<4x16x1xf32> to vector<4x16x32xf32>
    %121 = arith.mulf %119, %120 : vector<4x16x32xf32>
    %122 = vector.extract_strided_slice %121 {offsets = [0, 0, 0], sizes = [1, 16, 32], strides = [1, 1, 1]} : vector<4x16x32xf32> to vector<1x16x32xf32>
    %123 = vector.shape_cast %122 : vector<1x16x32xf32> to vector<16x32xf32>
    %124 = vector.extract_strided_slice %121 {offsets = [1, 0, 0], sizes = [1, 16, 32], strides = [1, 1, 1]} : vector<4x16x32xf32> to vector<1x16x32xf32>
    %125 = vector.shape_cast %124 : vector<1x16x32xf32> to vector<16x32xf32>
    %126 = vector.extract_strided_slice %121 {offsets = [2, 0, 0], sizes = [1, 16, 32], strides = [1, 1, 1]} : vector<4x16x32xf32> to vector<1x16x32xf32>
    %127 = vector.shape_cast %126 : vector<1x16x32xf32> to vector<16x32xf32>
    %128 = vector.extract_strided_slice %121 {offsets = [3, 0, 0], sizes = [1, 16, 32], strides = [1, 1, 1]} : vector<4x16x32xf32> to vector<1x16x32xf32>
    %129 = vector.shape_cast %128 : vector<1x16x32xf32> to vector<16x32xf32>
    %130 = tpu.concatenate %123, %125, %127, %129 in 1 : vector<16x32xf32>, vector<16x32xf32>, vector<16x32xf32>, vector<16x32xf32> -> vector<16x128xf32>
    %c0_20 = arith.constant 0 : index
    %c0_21 = arith.constant 0 : index
    %c0_22 = arith.constant 0 : index
    %131 = vector.load %arg5[%c0_20, %c0_21, %c0_22] : memref<1x16x128xf32, #tpu.memory_space<vmem>>, vector<1x16x128xf32>
    %132 = vector.shape_cast %131 : vector<1x16x128xf32> to vector<16x128xf32>
    %133 = vector.shape_cast %130 : vector<16x128xf32> to vector<1x16x128xf32>
    tpu.vector_store %arg5[%c0_20, %c0_21, %c0_22], %133 {strides = array<i32>} : memref<1x16x128xf32, #tpu.memory_space<vmem>>, vector<1x16x128xf32>,
    return
  }
  func.func @transform_0(%arg0: i32) -> i32 {
    %c0_i32 = arith.constant 0 : i32
    %c0_i32_0 = arith.constant 0 : i32
    return %c0_i32 : i32
  }
  func.func @transform_1(%arg0: i32) -> (i32, i32, i32, i32) {
    %c0_i32 = arith.constant 0 : i32
    %c0_i32_0 = arith.constant 0 : i32
    %c0_i32_1 = arith.constant 0 : i32
    %c0_i32_2 = arith.constant 0 : i32
    return %arg0, %c0_i32, %c0_i32_0, %c0_i32_1 : i32, i32, i32, i32
  }
  func.func @transform_2(%arg0: i32) -> (i32, i32, i32, i32) {
    %c0_i32 = arith.constant 0 : i32
    %c0_i32_0 = arith.constant 0 : i32
    %c0_i32_1 = arith.constant 0 : i32
    %c0_i32_2 = arith.constant 0 : i32
    return %arg0, %c0_i32, %c0_i32_0, %c0_i32_1 : i32, i32, i32, i32
  }
  func.func @transform_3(%arg0: i32) -> (i32, i32, i32, i32) {
    %c0_i32 = arith.constant 0 : i32
    %c0_i32_0 = arith.constant 0 : i32
    %c0_i32_1 = arith.constant 0 : i32
    %c0_i32_2 = arith.constant 0 : i32
    return %arg0, %c0_i32, %c0_i32_0, %c0_i32_1 : i32, i32, i32, i32
  }
  func.func @transform_4(%arg0: i32) -> (i32, i32, i32) {
    %c0_i32 = arith.constant 0 : i32
    %c0_i32_0 = arith.constant 0 : i32
    %c0_i32_1 = arith.constant 0 : i32
    return %arg0, %c0_i32, %c0_i32_0 : i32, i32, i32
  }
}

</mosaic_0001>

<llo_original>
// kernel: tpu_custom_call.1
$region0: #{tpu_custom_call.1}
  #allocation0 [shape = 'u32[]', space=smem, size = 0x4, offset = 0x4, fixed_abs, tag = 'smem constant byte address 0x4 - core index']
  #allocation1 [shape = 'u32[144,128]{1,0:T(1,128)}', space=vmem, size = 0x12000, scoped, tag = 'internal scratch']
  %s0 = inlined_call_operand.hbm [shape: f32[17], index: 0, kind: input, shape index: {}]
  %s1 = inlined_call_operand.hbm [shape: f32[2,4,16,32], index: 1, kind: input, shape index: {}]
  %s2 = inlined_call_operand.hbm [shape: f32[2,4,16,32], index: 2, kind: input, shape index: {}]
  %s3 = inlined_call_operand.hbm [shape: f32[2,4,16,32], index: 3, kind: input, shape index: {}]
  %s4 = inlined_call_operand.hbm [shape: f32[2,16,128], index: 4, kind: output, shape index: {}]
  %s5 = sld [smem:[#allocation0]]
  $region65: #{tpu_custom_call.1} parent=0
    _
  %s7 = ssub.s32 1, %s5
  %s8 = scalar_select 0, %s7, %s5
  $region1: #{tpu_custom_call.1} parent=0
    #allocation2 [shape = 'u8[512]{0}', space=smem, size = 0x200, scoped, tag = 'input window, operand 0, single buffered']
    #allocation3 [shape = 's32[2]{0}', space=sflag, size = 0x8, scoped, tag = 'scoped memory for tpu_custom_call.1']
    #allocation4 [shape = 's32[2]{0}', space=sflag, size = 0x8, scoped, tag = 'scoped memory for tpu_custom_call.1']
    #allocation5 [shape = 's32[2]{0}', space=sflag, size = 0x8, scoped, tag = 'scoped memory for tpu_custom_call.1']
    #allocation6 [shape = 'u8[65536]{0}', space=vmem, size = 0x10000, scoped, tag = 'input window, operand 1']
    #allocation7 [shape = 'u8[65536]{0}', space=vmem, size = 0x10000, scoped, tag = 'input window, operand 2']
    #allocation8 [shape = 's32[2]{0}', space=sflag, size = 0x8, scoped, tag = 'scoped memory for tpu_custom_call.1']
    #allocation9 [shape = 'u8[65536]{0}', space=vmem, size = 0x10000, scoped, tag = 'input window, operand 3']
    #allocation10 [shape = 'u8[16384]{0}', space=vmem, size = 0x4000, scoped, tag = 'output window, operand 0']
    %9 = vsyncpa [#allocation5], 0
    %10 = vsyncpa [#allocation3], 0
    %s11 = scalar_lea.sflag [#allocation3], 1
    %12 = vsyncpa %s11, 0
    %13 = vsyncpa [#allocation8], 0
    %s14 = scalar_lea.sflag [#allocation8], 1
    %15 = vsyncpa %s14, 0
    %16 = vsyncpa [#allocation4], 0
    %s17 = scalar_lea.sflag [#allocation4], 1
    %18 = vsyncpa %s17, 0
    loop: start=0, step=1, limit=4
    $region2: #{tpu_custom_call.1} parent=1 // loop_pre_header
      _
    $region3: #{tpu_custom_call.1} parent=1 // loop_header
      %s20 = sphi 0, %s24
      %p21 = scmp.ge.s32.totalorder %s20, 4
      %s28 = sphi 0, %s28
      %s30 = sphi 0, %s28
      %s31 = sphi 0, %s30
      %s45 = sphi 0, %s31
      %s51 = sphi 0, %s53
      %s54 = sphi 0, %s51
      %s55 = sphi 0, %s54
      %s71 = sphi 0, %s55
      %s77 = sphi 0, %s79
      %s80 = sphi 0, %s77
      %s81 = sphi 0, %s80
      %s97 = sphi 0, %s81
      %s103 = sphi 0, %s105
      %s106 = sphi 0, %s103
      %s107 = sphi 0, %s106
      %s123 = sphi 0, %s107
      %s129 = sphi 0, %s131
      %s132 = sphi 0, %s129
      %s133 = sphi 0, %s132
      %s149 = sphi 0, %s133
    $region4: #{tpu_custom_call.1} parent=1 // loop_header_branch
      %23 = sbr.rel (%p21) target = $region8
    $region5: #{tpu_custom_call.1} parent=1 // loop_body
      %s25 = ssub.s32 %s20, 1
      %s26 = ssub.s32 %s20, 2
      %s27 = sadd.s32 %s20, 1
      %s29 = sadd.s32 %s28, 1
      %p32 = scmp.eq.s32.totalorder %s20, 1
      %p33 = scmp.ne.s32.totalorder %s28, %s30
      %p34 = scmp.eq.s32.totalorder %s20, 0
      %p35 = por %p33, %p34
      %p36 = scmp.ne.s32.totalorder %s28, %s30
      %p37 = scmp.eq.s32.totalorder %s25, 1
      %p38 = por %p36, %p37
      %p39 = scmp.ne.s32.totalorder %s30, %s31
      %p40 = scmp.eq.s32.totalorder %s25, 0
      %p41 = por %p39, %p40
      %p42 = scmp.ne.s32.totalorder %s30, %s31
      %p43 = scmp.eq.s32.totalorder %s26, 1
      %p44 = por %p42, %p43
      %p46 = scmp.ne.s32.totalorder %s31, %s45
      %p47 = scmp.eq.s32.totalorder %s26, 0
      %p48 = por %p46, %p47
      %s49 = ssub.s32 %s20, %s27
      %p50 = scmp.eq.s32.totalorder %s49, 0
      %s52 = sadd.s32 %s51, 1
      %s53 = scalar_select %p50, %s51, %s52
      %p56 = pneg %p50
      %p57 = scmp.eq.s32.totalorder %s20, 1
      %p58 = por %p56, %p57
      %p59 = scmp.ne.s32.totalorder %s51, %s54
      %p60 = scmp.eq.s32.totalorder %s20, 0
      %p61 = por %p59, %p60
      %p62 = scmp.ne.s32.totalorder %s51, %s54
      %p63 = scmp.eq.s32.totalorder %s25, 1
      %p64 = por %p62, %p63
      %p65 = scmp.ne.s32.totalorder %s54, %s55
      %p66 = scmp.eq.s32.totalorder %s25, 0
      %p67 = por %p65, %p66
      %p68 = scmp.ne.s32.totalorder %s54, %s55
      %p69 = scmp.eq.s32.totalorder %s26, 1
      %p70 = por %p68, %p69
      %p72 = scmp.ne.s32.totalorder %s55, %s71
      %p73 = scmp.eq.s32.totalorder %s26, 0
      %p74 = por %p72, %p73
      %s75 = ssub.s32 %s20, %s27
      %p76 = scmp.eq.s32.totalorder %s75, 0
      %s78 = sadd.s32 %s77, 1
      %s79 = scalar_select %p76, %s77, %s78
      %p82 = pneg %p76
      %p83 = scmp.eq.s32.totalorder %s20, 1
      %p84 = por %p82, %p83
      %p85 = scmp.ne.s32.totalorder %s77, %s80
      %p86 = scmp.eq.s32.totalorder %s20, 0
      %p87 = por %p85, %p86
      %p88 = scmp.ne.s32.totalorder %s77, %s80
      %p89 = scmp.eq.s32.totalorder %s25, 1
      %p90 = por %p88, %p89
      %p91 = scmp.ne.s32.totalorder %s80, %s81
      %p92 = scmp.eq.s32.totalorder %s25, 0
      %p93 = por %p91, %p92
      %p94 = scmp.ne.s32.totalorder %s80, %s81
      %p95 = scmp.eq.s32.totalorder %s26, 1
      %p96 = por %p94, %p95
      %p98 = scmp.ne.s32.totalorder %s81, %s97
      %p99 = scmp.eq.s32.totalorder %s26, 0
      %p100 = por %p98, %p99
      %s101 = ssub.s32 %s20, %s27
      %p102 = scmp.eq.s32.totalorder %s101, 0
      %s104 = sadd.s32 %s103, 1
      %s105 = scalar_select %p102, %s103, %s104
      %p108 = pneg %p102
      %p109 = scmp.eq.s32.totalorder %s20, 1
      %p110 = por %p108, %p109
      %p111 = scmp.ne.s32.totalorder %s103, %s106
      %p112 = scmp.eq.s32.totalorder %s20, 0
      %p113 = por %p111, %p112
      %p114 = scmp.ne.s32.totalorder %s103, %s106
      %p115 = scmp.eq.s32.totalorder %s25, 1
      %p116 = por %p114, %p115
      %p117 = scmp.ne.s32.totalorder %s106, %s107
      %p118 = scmp.eq.s32.totalorder %s25, 0
      %p119 = por %p117, %p118
      %p120 = scmp.ne.s32.totalorder %s106, %s107
      %p121 = scmp.eq.s32.totalorder %s26, 1
      %p122 = por %p120, %p121
      %p124 = scmp.ne.s32.totalorder %s107, %s123
      %p125 = scmp.eq.s32.totalorder %s26, 0
      %p126 = por %p124, %p125
      %s127 = ssub.s32 %s20, %s27
      %p128 = scmp.eq.s32.totalorder %s127, 0
      %s130 = sadd.s32 %s129, 1
      %s131 = scalar_select %p128, %s129, %s130
      %p134 = pneg %p128
      %p135 = scmp.eq.s32.totalorder %s20, 1
      %p136 = por %p134, %p135
      %p137 = scmp.ne.s32.totalorder %s129, %s132
      %p138 = scmp.eq.s32.totalorder %s20, 0
      %p139 = por %p137, %p138
      %p140 = scmp.ne.s32.totalorder %s129, %s132
      %p141 = scmp.eq.s32.totalorder %s25, 1
      %p142 = por %p140, %p141
      %p143 = scmp.ne.s32.totalorder %s132, %s133
      %p144 = scmp.eq.s32.totalorder %s25, 0
      %p145 = por %p143, %p144
      %p146 = scmp.ne.s32.totalorder %s132, %s133
      %p147 = scmp.eq.s32.totalorder %s26, 1
      %p148 = por %p146, %p147
      %p150 = scmp.ne.s32.totalorder %s133, %s149
      %p151 = scmp.eq.s32.totalorder %s26, 0
      %p152 = por %p150, %p151
      %p153 = scmp.le.s32.totalorder 1, %s20
      %p154 = scmp.lt.s32.totalorder %s20, 3
      %p155 = pnand %p153, %p154
      %p156 = pneg %p155
      // Predicated region
      $region9: #{tpu_custom_call.1} parent=5 // pred_check
        _
      $region10: #{tpu_custom_call.1} parent=5 // pred_check_branch
        %158 = sbr.rel (%p155) target = $region12
      $region11: #{tpu_custom_call.1} parent=5 // pred_region
        %s159 = ssub.s32 %s20, 1
        // Predicated region
        $region13: #{tpu_custom_call.1} parent=11 // pred_check
          %p160 = pneg %p41
        $region14: #{tpu_custom_call.1} parent=11 // pred_check_branch
          %162 = sbr.rel (%p160) target = $region16
        $region15: #{tpu_custom_call.1} parent=11 // pred_region
          %s164 = ssub.s32 16, 16
          %165 = vsyncadd [#allocation5], %s164
          %168 = dma.hbm_to_smem %s0, 16, [#allocation2], [#allocation5]
        $region16: #{tpu_custom_call.1} parent=11 // pred_fallthru
          _
      $region12: #{tpu_custom_call.1} parent=5 // pred_fallthru
        _
      %p169 = scmp.lt.s32.totalorder %s20, 2
      // Predicated region
      $region17: #{tpu_custom_call.1} parent=5 // pred_check
        %p170 = pneg %p169
      $region18: #{tpu_custom_call.1} parent=5 // pred_check_branch
        %172 = sbr.rel (%p170) target = $region20
      $region19: #{tpu_custom_call.1} parent=5 // pred_region
        // Predicated region
        $region21: #{tpu_custom_call.1} parent=19 // pred_check
          %p173 = pneg %p61
        $region22: #{tpu_custom_call.1} parent=19 // pred_check_branch
          %175 = sbr.rel (%p173) target = $region24
        $region23: #{tpu_custom_call.1} parent=19 // pred_region
          %s176 = sand.u32 %s51, 1
          %s177 = scalar_lea.sflag [#allocation3], %s176
          %s178 = sand.u32 %s51, 1
          %s179 = smul.addr %s178, 64
          %s180 = scalar_lea.vmem [#allocation6], %s179
          %s182 = ssub.s32 1024, 1024
          %183 = vsyncadd %s177, %s182
          %s184 = smul.addr %s20, 8
          %s185 = smul.addr %s184, 128
          %s186 = scalar_lea.hbm %s1, %s185
          %s187 = sshll.u32 %s180, 4
          %s188 = int_to_ptr.vmem [resolvable:$true] %s187
          %193 = dma.hbm_to_vmem [thread:$0]  %s186, 1024, %s188, %s177, 128, 128, 8
        $region24: #{tpu_custom_call.1} parent=19 // pred_fallthru
          _
        // Predicated region
        $region25: #{tpu_custom_call.1} parent=19 // pred_check
          %p194 = pneg %p87
        $region26: #{tpu_custom_call.1} parent=19 // pred_check_branch
          %196 = sbr.rel (%p194) target = $region28
        $region27: #{tpu_custom_call.1} parent=19 // pred_region
          %s197 = sand.u32 %s20, 1
          %s198 = scalar_lea.sflag [#allocation8], %s197
          %s199 = sand.u32 %s77, 1
          %s200 = smul.addr %s199, 64
          %s201 = scalar_lea.vmem [#allocation7], %s200
          %s203 = ssub.s32 1024, 1024
          %204 = vsyncadd %s198, %s203
          %s205 = smul.addr %s20, 8
          %s206 = smul.addr %s205, 128
          %s207 = scalar_lea.hbm %s2, %s206
          %s208 = sshll.u32 %s201, 4
          %s209 = int_to_ptr.vmem [resolvable:$true] %s208
          %214 = dma.hbm_to_vmem [thread:$0]  %s207, 1024, %s209, %s198, 128, 128, 8
        $region28: #{tpu_custom_call.1} parent=19 // pred_fallthru
          _
        // Predicated region
        $region29: #{tpu_custom_call.1} parent=19 // pred_check
          %p215 = pneg %p113
        $region30: #{tpu_custom_call.1} parent=19 // pred_check_branch
          %217 = sbr.rel (%p215) target = $region32
        $region31: #{tpu_custom_call.1} parent=19 // pred_region
          %s218 = sand.u32 %s20, 1
          %s219 = scalar_lea.sflag [#allocation8], %s218
          %s220 = sand.u32 %s103, 1
          %s221 = smul.addr %s220, 64
          %s222 = scalar_lea.vmem [#allocation9], %s221
          %s224 = ssub.s32 1024, 1024
          %225 = vsyncadd %s219, %s224
          %s226 = smul.addr %s20, 8
          %s227 = smul.addr %s226, 128
          %s228 = scalar_lea.hbm %s3, %s227
          %s229 = sshll.u32 %s222, 4
          %s230 = int_to_ptr.vmem [resolvable:$true] %s229
          %235 = dma.hbm_to_vmem [thread:$0]  %s228, 1024, %s230, %s219, 128, 128, 8
        $region32: #{tpu_custom_call.1} parent=19 // pred_fallthru
          _
      $region20: #{tpu_custom_call.1} parent=5 // pred_fallthru
        _
      %p236 = scmp.le.s32.totalorder 1, %s20
      %p237 = scmp.lt.s32.totalorder %s20, 3
      %p238 = pnand %p236, %p237
      %p239 = pneg %p238
      // Predicated region
      $region33: #{tpu_custom_call.1} parent=5 // pred_check
        _
      $region34: #{tpu_custom_call.1} parent=5 // pred_check_branch
        %241 = sbr.rel (%p238) target = $region36
      $region35: #{tpu_custom_call.1} parent=5 // pred_region
        %s242 = ssub.s32 %s20, 1
        // Predicated region
        $region37: #{tpu_custom_call.1} parent=35 // pred_check
          %p243 = pneg %p41
        $region38: #{tpu_custom_call.1} parent=35 // pred_check_branch
          %245 = sbr.rel (%p243) target = $region40
        $region39: #{tpu_custom_call.1} parent=35 // pred_region
          %246 = dma.done [#allocation5], 16
        $region40: #{tpu_custom_call.1} parent=35 // pred_fallthru
          _
        %s247 = sand.u32 %s54, 1
        %s248 = scalar_lea.sflag [#allocation3], %s247
        %s249 = sand.u32 %s54, 1
        %s250 = smul.addr %s249, 64
        %s251 = scalar_lea.vmem [#allocation6], %s250
        // Predicated region
        $region41: #{tpu_custom_call.1} parent=35 // pred_check
          %p252 = pneg %p67
        $region42: #{tpu_custom_call.1} parent=35 // pred_check_branch
          %254 = sbr.rel (%p252) target = $region44
        $region43: #{tpu_custom_call.1} parent=35 // pred_region
          %255 = dma.done %s248, 1024
        $region44: #{tpu_custom_call.1} parent=35 // pred_fallthru
          _
        %s256 = sand.u32 %s25, 1
        %s257 = scalar_lea.sflag [#allocation8], %s256
        %s258 = sand.u32 %s80, 1
        %s259 = smul.addr %s258, 64
        %s260 = scalar_lea.vmem [#allocation7], %s259
        // Predicated region
        $region45: #{tpu_custom_call.1} parent=35 // pred_check
          %p261 = pneg %p93
        $region46: #{tpu_custom_call.1} parent=35 // pred_check_branch
          %263 = sbr.rel (%p261) target = $region48
        $region47: #{tpu_custom_call.1} parent=35 // pred_region
          %264 = dma.done %s257, 1024
        $region48: #{tpu_custom_call.1} parent=35 // pred_fallthru
          _
        %s265 = sand.u32 %s25, 1
        %s266 = scalar_lea.sflag [#allocation8], %s265
        %s267 = sand.u32 %s106, 1
        %s268 = smul.addr %s267, 64
        %s269 = scalar_lea.vmem [#allocation9], %s268
        // Predicated region
        $region49: #{tpu_custom_call.1} parent=35 // pred_check
          %p270 = pneg %p119
        $region50: #{tpu_custom_call.1} parent=35 // pred_check_branch
          %272 = sbr.rel (%p270) target = $region52
        $region51: #{tpu_custom_call.1} parent=35 // pred_region
          %273 = dma.done %s266, 1024
        $region52: #{tpu_custom_call.1} parent=35 // pred_fallthru
          _
        %274 = sfence
        %p275 = pneg %p41
        %p276 = pneg %p38
        %s277 = sand.u32 %s54, 1
        %s278 = scalar_lea.sflag [#allocation3], %s277
        %s279 = sand.u32 %s54, 1
        %s280 = smul.addr %s279, 64
        %s281 = scalar_lea.vmem [#allocation6], %s280
        %p282 = pneg %p67
        %p283 = pneg %p64
        %s284 = sand.u32 %s25, 1
        %s285 = scalar_lea.sflag [#allocation8], %s284
        %s286 = sand.u32 %s80, 1
        %s287 = smul.addr %s286, 64
        %s288 = scalar_lea.vmem [#allocation7], %s287
        %p289 = pneg %p93
        %p290 = pneg %p90
        %s291 = sand.u32 %s25, 1
        %s292 = scalar_lea.sflag [#allocation8], %s291
        %s293 = sand.u32 %s106, 1
        %s294 = smul.addr %s293, 64
        %s295 = scalar_lea.vmem [#allocation9], %s294
        %p296 = pneg %p119
        %p297 = pneg %p116
        %p298 = pneg %p145
        %p299 = pneg %p142
        %s300 = sand.u32 %s132, 1
        %s301 = scalar_lea.sflag [#allocation4], %s300
        %s302 = sand.u32 %s132, 1
        %s303 = smul.addr %s302, 16
        %s304 = scalar_lea.vmem [#allocation10], %s303
        %v305 = vld [vmem:[%s251] sm:$0xff]
        %v306 = vld [vmem:[%s251 + $0x8] sm:$0xff]
        %v307 = vld [vmem:[%s251 + $0x10] sm:$0xff]
        %v308 = vld [vmem:[%s251 + $0x18] sm:$0xff]
        %v309 = vld [vmem:[%s251 + $0x20] sm:$0xff]
        %v310 = vld [vmem:[%s251 + $0x28] sm:$0xff]
        %v311 = vld [vmem:[%s251 + $0x30] sm:$0xff]
        %v312 = vld [vmem:[%s251 + $0x38] sm:$0xff]
        %v313 = vld [vmem:[%s260] sm:$0xff]
        %v314 = vld [vmem:[%s260 + $0x8] sm:$0xff]
        %v315 = vld [vmem:[%s260 + $0x10] sm:$0xff]
        %v316 = vld [vmem:[%s260 + $0x18] sm:$0xff]
        %v317 = vld [vmem:[%s260 + $0x20] sm:$0xff]
        %v318 = vld [vmem:[%s260 + $0x28] sm:$0xff]
        %v319 = vld [vmem:[%s260 + $0x30] sm:$0xff]
        %v320 = vld [vmem:[%s260 + $0x38] sm:$0xff]
        %v321 = vld [vmem:[%s269] sm:$0xff]
        %v322 = vld [vmem:[%s269 + $0x8] sm:$0xff]
        %v323 = vld [vmem:[%s269 + $0x10] sm:$0xff]
        %v324 = vld [vmem:[%s269 + $0x18] sm:$0xff]
        %v325 = vld [vmem:[%s269 + $0x20] sm:$0xff]
        %v326 = vld [vmem:[%s269 + $0x28] sm:$0xff]
        %v327 = vld [vmem:[%s269 + $0x30] sm:$0xff]
        %v328 = vld [vmem:[%s269 + $0x38] sm:$0xff]
        %vm329 = vcmask 261120
        %v331 = vsel %vm329, %v305, 0
        %v334 = vsel %vm329, %v306, 0
        %v337 = vsel %vm329, %v313, 0
        %v340 = vsel %vm329, %v314, 0
        %342 = vmatprep.subr.mxu0 0.0
        %343 = vmatpush1.xpose.msra.mxu0 %v337
        %344 = vmatprep.subr.mxu0 0.0
        %345 = vmatpush1.xpose.msra.mxu0 %v340
        %346 = vmatprep.subr.mxu0 0.0
        %347 = vmatpush1.xpose.msra.mxu0 0.0
        %348 = vmatprep.subr.mxu0 0.0
        %349 = vmatpush1.xpose.msra.mxu0 0.0
        %350 = vmatprep.subr.mxu0 0.0
        %351 = vmatpush1.xpose.msra.mxu0 0.0
        %352 = vmatprep.subr.mxu0 0.0
        %353 = vmatpush1.xpose.msra.mxu0 0.0
        %354 = vmatprep.subr.mxu0 0.0
        %355 = vmatpush1.xpose.msra.mxu0 0.0
        %356 = vmatprep.subr.mxu0 0.0
        %357 = vmatpush1.xpose.msra.mxu0 0.0
        %358 = vmatprep.subr.mxu0 0.0
        %359 = vmatpush1.xpose.msra.mxu0 0.0
        %360 = vmatprep.subr.mxu0 0.0
        %361 = vmatpush1.xpose.msra.mxu0 0.0
        %362 = vmatprep.subr.mxu0 0.0
        %363 = vmatpush1.xpose.msra.mxu0 0.0
        %364 = vmatprep.subr.mxu0 0.0
        %365 = vmatpush1.xpose.msra.mxu0 0.0
        %366 = vmatprep.subr.mxu0 0.0
        %367 = vmatpush1.xpose.msra.mxu0 0.0
        %368 = vmatprep.subr.mxu0 0.0
        %369 = vmatpush1.xpose.msra.mxu0 0.0
        %370 = vmatprep.subr.mxu0 0.0
        %371 = vmatpush1.xpose.msra.mxu0 0.0
        %372 = vmatprep.subr.mxu0 0.0
        %373 = vmatpush1.xpose.msra.mxu0 0.0
        %374 = vmatprep.subr.mxu0 0.0
        %375 = vmatpush1.xpose.msra.mxu0 0.0
        %376 = vmatprep.subr.mxu0 0.0
        %377 = vmatpush1.xpose.msra.mxu0 0.0
        %378 = vmatprep.subr.mxu0 0.0
        %379 = vmatpush1.xpose.msra.mxu0 0.0
        %380 = vmatprep.subr.mxu0 0.0
        %381 = vmatpush1.xpose.msra.mxu0 0.0
        %382 = vmatprep.subr.mxu0 0.0
        %383 = vmatpush1.xpose.msra.mxu0 0.0
        %384 = vmatprep.subr.mxu0 0.0
        %385 = vmatpush1.xpose.msra.mxu0 0.0
        %386 = vmatprep.subr.mxu0 0.0
        %387 = vmatpush1.xpose.msra.mxu0 0.0
        %388 = vmatprep.subr.mxu0 0.0
        %389 = vmatpush1.xpose.msra.mxu0 0.0
        %390 = vmatprep.subr.mxu0 0.0
        %391 = vmatpush1.xpose.msra.mxu0 0.0
        %392 = vmatprep.subr.mxu0 0.0
        %393 = vmatpush1.xpose.msra.mxu0 0.0
        %394 = vmatprep.subr.mxu0 0.0
        %395 = vmatpush1.xpose.msra.mxu0 0.0
        %396 = vmatprep.subr.mxu0 0.0
        %397 = vmatpush1.xpose.msra.mxu0 0.0
        %398 = vmatprep.subr.mxu0 0.0
        %399 = vmatpush1.xpose.msra.mxu0 0.0
        %400 = vmatprep.subr.mxu0 0.0
        %401 = vmatpush1.xpose.msra.mxu0 0.0
        %402 = vmatprep.subr.mxu0 0.0
        %403 = vmatpush1.xpose.msra.mxu0 0.0
        %404 = vmatprep.subr.mxu0 0.0
        %405 = vmatpush1.xpose.msra.mxu0 0.0
        %406 = vmatprep.mubr.f32.mxu0 0.0
        %407 = vmatmul.mubr.f32.gmra.mrb[0].mxu0 %v331
        %v408 = vpop.f32.mrb[0].mxu0
        %v409 = vadd.f32 0.0, %v408
        %v410 = vpop.f32.mrb[0].mxu0
        %411 = vmatprep.mubr.f32.mxu0 0.0
        %412 = vmatmul.mubr.f32.gmra.mrb[0].mxu0 %v334
        %v413 = vpop.f32.mrb[0].mxu0
        %v414 = vadd.f32 0.0, %v413
        %v415 = vpop.f32.mrb[0].mxu0
        %416 = vdwg.mxu0
        %v418 = vsel %vm329, %v307, 0
        %v421 = vsel %vm329, %v308, 0
        %v424 = vsel %vm329, %v315, 0
        %v427 = vsel %vm329, %v316, 0
        %429 = vmatprep.subr.mxu0 0.0
        %430 = vmatpush1.xpose.msra.mxu0 %v424
        %431 = vmatprep.subr.mxu0 0.0
        %432 = vmatpush1.xpose.msra.mxu0 %v427
        %433 = vmatprep.subr.mxu0 0.0
        %434 = vmatpush1.xpose.msra.mxu0 0.0
        %435 = vmatprep.subr.mxu0 0.0
        %436 = vmatpush1.xpose.msra.mxu0 0.0
        %437 = vmatprep.subr.mxu0 0.0
        %438 = vmatpush1.xpose.msra.mxu0 0.0
        %439 = vmatprep.subr.mxu0 0.0
        %440 = vmatpush1.xpose.msra.mxu0 0.0
        %441 = vmatprep.subr.mxu0 0.0
        %442 = vmatpush1.xpose.msra.mxu0 0.0
        %443 = vmatprep.subr.mxu0 0.0
        %444 = vmatpush1.xpose.msra.mxu0 0.0
        %445 = vmatprep.subr.mxu0 0.0
        %446 = vmatpush1.xpose.msra.mxu0 0.0
        %447 = vmatprep.subr.mxu0 0.0
        %448 = vmatpush1.xpose.msra.mxu0 0.0
        %449 = vmatprep.subr.mxu0 0.0
        %450 = vmatpush1.xpose.msra.mxu0 0.0
        %451 = vmatprep.subr.mxu0 0.0
        %452 = vmatpush1.xpose.msra.mxu0 0.0
        %453 = vmatprep.subr.mxu0 0.0
        %454 = vmatpush1.xpose.msra.mxu0 0.0
        %455 = vmatprep.subr.mxu0 0.0
        %456 = vmatpush1.xpose.msra.mxu0 0.0
        %457 = vmatprep.subr.mxu0 0.0
        %458 = vmatpush1.xpose.msra.mxu0 0.0
        %459 = vmatprep.subr.mxu0 0.0
        %460 = vmatpush1.xpose.msra.mxu0 0.0
        %461 = vmatprep.subr.mxu0 0.0
        %462 = vmatpush1.xpose.msra.mxu0 0.0
        %463 = vmatprep.subr.mxu0 0.0
        %464 = vmatpush1.xpose.msra.mxu0 0.0
        %465 = vmatprep.subr.mxu0 0.0
        %466 = vmatpush1.xpose.msra.mxu0 0.0
        %467 = vmatprep.subr.mxu0 0.0
        %468 = vmatpush1.xpose.msra.mxu0 0.0
        %469 = vmatprep.subr.mxu0 0.0
        %470 = vmatpush1.xpose.msra.mxu0 0.0
        %471 = vmatprep.subr.mxu0 0.0
        %472 = vmatpush1.xpose.msra.mxu0 0.0
        %473 = vmatprep.subr.mxu0 0.0
        %474 = vmatpush1.xpose.msra.mxu0 0.0
        %475 = vmatprep.subr.mxu0 0.0
        %476 = vmatpush1.xpose.msra.mxu0 0.0
        %477 = vmatprep.subr.mxu0 0.0
        %478 = vmatpush1.xpose.msra.mxu0 0.0
        %479 = vmatprep.subr.mxu0 0.0
        %480 = vmatpush1.xpose.msra.mxu0 0.0
        %481 = vmatprep.subr.mxu0 0.0
        %482 = vmatpush1.xpose.msra.mxu0 0.0
        %483 = vmatprep.subr.mxu0 0.0
        %484 = vmatpush1.xpose.msra.mxu0 0.0
        %485 = vmatprep.subr.mxu0 0.0
        %486 = vmatpush1.xpose.msra.mxu0 0.0
        %487 = vmatprep.subr.mxu0 0.0
        %488 = vmatpush1.xpose.msra.mxu0 0.0
        %489 = vmatprep.subr.mxu0 0.0
        %490 = vmatpush1.xpose.msra.mxu0 0.0
        %491 = vmatprep.subr.mxu0 0.0
        %492 = vmatpush1.xpose.msra.mxu0 0.0
        %493 = vmatprep.mubr.f32.mxu0 0.0
        %494 = vmatmul.mubr.f32.gmra.mrb[0].mxu0 %v418
        %v495 = vpop.f32.mrb[0].mxu0
        %v496 = vadd.f32 0.0, %v495
        %v497 = vpop.f32.mrb[0].mxu0
        %498 = vmatprep.mubr.f32.mxu0 0.0
        %499 = vmatmul.mubr.f32.gmra.mrb[0].mxu0 %v421
        %v500 = vpop.f32.mrb[0].mxu0
        %v501 = vadd.f32 0.0, %v500
        %v502 = vpop.f32.mrb[0].mxu0
        %503 = vdwg.mxu0
        %v505 = vsel %vm329, %v309, 0
        %v508 = vsel %vm329, %v310, 0
        %v511 = vsel %vm329, %v317, 0
        %v514 = vsel %vm329, %v318, 0
        %516 = vmatprep.subr.mxu0 0.0
        %517 = vmatpush1.xpose.msra.mxu0 %v511
        %518 = vmatprep.subr.mxu0 0.0
        %519 = vmatpush1.xpose.msra.mxu0 %v514
        %520 = vmatprep.subr.mxu0 0.0
        %521 = vmatpush1.xpose.msra.mxu0 0.0
        %522 = vmatprep.subr.mxu0 0.0
        %523 = vmatpush1.xpose.msra.mxu0 0.0
        %524 = vmatprep.subr.mxu0 0.0
        %525 = vmatpush1.xpose.msra.mxu0 0.0
        %526 = vmatprep.subr.mxu0 0.0
        %527 = vmatpush1.xpose.msra.mxu0 0.0
        %528 = vmatprep.subr.mxu0 0.0
        %529 = vmatpush1.xpose.msra.mxu0 0.0
        %530 = vmatprep.subr.mxu0 0.0
        %531 = vmatpush1.xpose.msra.mxu0 0.0
        %532 = vmatprep.subr.mxu0 0.0
        %533 = vmatpush1.xpose.msra.mxu0 0.0
        %534 = vmatprep.subr.mxu0 0.0
        %535 = vmatpush1.xpose.msra.mxu0 0.0
        %536 = vmatprep.subr.mxu0 0.0
        %537 = vmatpush1.xpose.msra.mxu0 0.0
        %538 = vmatprep.subr.mxu0 0.0
        %539 = vmatpush1.xpose.msra.mxu0 0.0
        %540 = vmatprep.subr.mxu0 0.0
        %541 = vmatpush1.xpose.msra.mxu0 0.0
        %542 = vmatprep.subr.mxu0 0.0
        %543 = vmatpush1.xpose.msra.mxu0 0.0
        %544 = vmatprep.subr.mxu0 0.0
        %545 = vmatpush1.xpose.msra.mxu0 0.0
        %546 = vmatprep.subr.mxu0 0.0
        %547 = vmatpush1.xpose.msra.mxu0 0.0
        %548 = vmatprep.subr.mxu0 0.0
        %549 = vmatpush1.xpose.msra.mxu0 0.0
        %550 = vmatprep.subr.mxu0 0.0
        %551 = vmatpush1.xpose.msra.mxu0 0.0
        %552 = vmatprep.subr.mxu0 0.0
        %553 = vmatpush1.xpose.msra.mxu0 0.0
        %554 = vmatprep.subr.mxu0 0.0
        %555 = vmatpush1.xpose.msra.mxu0 0.0
        %556 = vmatprep.subr.mxu0 0.0
        %557 = vmatpush1.xpose.msra.mxu0 0.0
        %558 = vmatprep.subr.mxu0 0.0
        %559 = vmatpush1.xpose.msra.mxu0 0.0
        %560 = vmatprep.subr.mxu0 0.0
        %561 = vmatpush1.xpose.msra.mxu0 0.0
        %562 = vmatprep.subr.mxu0 0.0
        %563 = vmatpush1.xpose.msra.mxu0 0.0
        %564 = vmatprep.subr.mxu0 0.0
        %565 = vmatpush1.xpose.msra.mxu0 0.0
        %566 = vmatprep.subr.mxu0 0.0
        %567 = vmatpush1.xpose.msra.mxu0 0.0
        %568 = vmatprep.subr.mxu0 0.0
        %569 = vmatpush1.xpose.msra.mxu0 0.0
        %570 = vmatprep.subr.mxu0 0.0
        %571 = vmatpush1.xpose.msra.mxu0 0.0
        %572 = vmatprep.subr.mxu0 0.0
        %573 = vmatpush1.xpose.msra.mxu0 0.0
        %574 = vmatprep.subr.mxu0 0.0
        %575 = vmatpush1.xpose.msra.mxu0 0.0
        %576 = vmatprep.subr.mxu0 0.0
        %577 = vmatpush1.xpose.msra.mxu0 0.0
        %578 = vmatprep.subr.mxu0 0.0
        %579 = vmatpush1.xpose.msra.mxu0 0.0
        %580 = vmatprep.mubr.f32.mxu0 0.0
        %581 = vmatmul.mubr.f32.gmra.mrb[0].mxu0 %v505
        %v582 = vpop.f32.mrb[0].mxu0
        %v583 = vadd.f32 0.0, %v582
        %v584 = vpop.f32.mrb[0].mxu0
        %585 = vmatprep.mubr.f32.mxu0 0.0
        %586 = vmatmul.mubr.f32.gmra.mrb[0].mxu0 %v508
        %v587 = vpop.f32.mrb[0].mxu0
        %v588 = vadd.f32 0.0, %v587
        %v589 = vpop.f32.mrb[0].mxu0
        %590 = vdwg.mxu0
        %v592 = vsel %vm329, %v311, 0
        %v595 = vsel %vm329, %v312, 0
        %v598 = vsel %vm329, %v319, 0
        %v601 = vsel %vm329, %v320, 0
        %603 = vmatprep.subr.mxu0 0.0
        %604 = vmatpush1.xpose.msra.mxu0 %v598
        %605 = vmatprep.subr.mxu0 0.0
        %606 = vmatpush1.xpose.msra.mxu0 %v601
        %607 = vmatprep.subr.mxu0 0.0
        %608 = vmatpush1.xpose.msra.mxu0 0.0
        %609 = vmatprep.subr.mxu0 0.0
        %610 = vmatpush1.xpose.msra.mxu0 0.0
        %611 = vmatprep.subr.mxu0 0.0
        %612 = vmatpush1.xpose.msra.mxu0 0.0
        %613 = vmatprep.subr.mxu0 0.0
        %614 = vmatpush1.xpose.msra.mxu0 0.0
        %615 = vmatprep.subr.mxu0 0.0
        %616 = vmatpush1.xpose.msra.mxu0 0.0
        %617 = vmatprep.subr.mxu0 0.0
        %618 = vmatpush1.xpose.msra.mxu0 0.0
        %619 = vmatprep.subr.mxu0 0.0
        %620 = vmatpush1.xpose.msra.mxu0 0.0
        %621 = vmatprep.subr.mxu0 0.0
        %622 = vmatpush1.xpose.msra.mxu0 0.0
        %623 = vmatprep.subr.mxu0 0.0
        %624 = vmatpush1.xpose.msra.mxu0 0.0
        %625 = vmatprep.subr.mxu0 0.0
        %626 = vmatpush1.xpose.msra.mxu0 0.0
        %627 = vmatprep.subr.mxu0 0.0
        %628 = vmatpush1.xpose.msra.mxu0 0.0
        %629 = vmatprep.subr.mxu0 0.0
        %630 = vmatpush1.xpose.msra.mxu0 0.0
        %631 = vmatprep.subr.mxu0 0.0
        %632 = vmatpush1.xpose.msra.mxu0 0.0
        %633 = vmatprep.subr.mxu0 0.0
        %634 = vmatpush1.xpose.msra.mxu0 0.0
        %635 = vmatprep.subr.mxu0 0.0
        %636 = vmatpush1.xpose.msra.mxu0 0.0
        %637 = vmatprep.subr.mxu0 0.0
        %638 = vmatpush1.xpose.msra.mxu0 0.0
        %639 = vmatprep.subr.mxu0 0.0
        %640 = vmatpush1.xpose.msra.mxu0 0.0
        %641 = vmatprep.subr.mxu0 0.0
        %642 = vmatpush1.xpose.msra.mxu0 0.0
        %643 = vmatprep.subr.mxu0 0.0
        %644 = vmatpush1.xpose.msra.mxu0 0.0
        %645 = vmatprep.subr.mxu0 0.0
        %646 = vmatpush1.xpose.msra.mxu0 0.0
        %647 = vmatprep.subr.mxu0 0.0
        %648 = vmatpush1.xpose.msra.mxu0 0.0
        %649 = vmatprep.subr.mxu0 0.0
        %650 = vmatpush1.xpose.msra.mxu0 0.0
        %651 = vmatprep.subr.mxu0 0.0
        %652 = vmatpush1.xpose.msra.mxu0 0.0
        %653 = vmatprep.subr.mxu0 0.0
        %654 = vmatpush1.xpose.msra.mxu0 0.0
        %655 = vmatprep.subr.mxu0 0.0
        %656 = vmatpush1.xpose.msra.mxu0 0.0
        %657 = vmatprep.subr.mxu0 0.0
        %658 = vmatpush1.xpose.msra.mxu0 0.0
        %659 = vmatprep.subr.mxu0 0.0
        %660 = vmatpush1.xpose.msra.mxu0 0.0
        %661 = vmatprep.subr.mxu0 0.0
        %662 = vmatpush1.xpose.msra.mxu0 0.0
        %663 = vmatprep.subr.mxu0 0.0
        %664 = vmatpush1.xpose.msra.mxu0 0.0
        %665 = vmatprep.subr.mxu0 0.0
        %666 = vmatpush1.xpose.msra.mxu0 0.0
        %667 = vmatprep.mubr.f32.mxu0 0.0
        %668 = vmatmul.mubr.f32.gmra.mrb[0].mxu0 %v592
        %v669 = vpop.f32.mrb[0].mxu0
        %v670 = vadd.f32 0.0, %v669
        %v671 = vpop.f32.mrb[0].mxu0
        %672 = vmatprep.mubr.f32.mxu0 0.0
        %673 = vmatmul.mubr.f32.gmra.mrb[0].mxu0 %v595
        %v674 = vpop.f32.mrb[0].mxu0
        %v675 = vadd.f32 0.0, %v674
        %v676 = vpop.f32.mrb[0].mxu0
        %677 = vdwg.mxu0
        %v678 = vlaneseq
        %v679 = vshrl.u32 %v678, 7
        %v680 = vadd.s32 %v679, 8
        %v681 = vlaneseq
        %v682 = vand.u32 %v681, 127
        %v683 = vsub.s32 %v682, %v679
        %v684 = vsub.s32 %v682, %v680
        %vm685 = vcmp.gt.s32.totalorder %v683, 4294967288
        %v686 = vsel %vm685, %v683, 4294967288
        %vm687 = vcmp.gt.s32.totalorder %v684, 4294967288
        %v688 = vsel %vm687, %v684, 4294967288
        %vm689 = vcmp.lt.s32.totalorder %v686, 8
        %v690 = vsel %vm689, %v686, 8
        %vm691 = vcmp.lt.s32.totalorder %v688, 8
        %v692 = vsel %vm691, %v688, 8
        %v693 = vadd.s32 %v690, 8
        %v694 = vadd.s32 %v692, 8
        %vm695 = vcmp.eq.s32.totalorder %v693, 0
        %vm696 = vcmp.eq.s32.totalorder %v694, 0
        %s697 = sld [smem:[#allocation2]]
        %v698 = vstv %s697
        %v699 = vsel %vm695, %v698, 0.0
        %v700 = vsel %vm696, %v698, 0.0
        %vm701 = vcmp.eq.s32.totalorder %v693, 1
        %vm702 = vcmp.eq.s32.totalorder %v694, 1
        %s703 = sld [smem:[#allocation2 + $0x1]]
        %v704 = vstv %s703
        %v705 = vsel %vm701, %v704, %v699
        %v706 = vsel %vm702, %v704, %v700
        %vm707 = vcmp.eq.s32.totalorder %v693, 2
        %vm708 = vcmp.eq.s32.totalorder %v694, 2
        %s709 = sld [smem:[#allocation2 + $0x2]]
        %v710 = vstv %s709
        %v711 = vsel %vm707, %v710, %v705
        %v712 = vsel %vm708, %v710, %v706
        %vm713 = vcmp.eq.s32.totalorder %v693, 3
        %vm714 = vcmp.eq.s32.totalorder %v694, 3
        %s715 = sld [smem:[#allocation2 + $0x3]]
        %v716 = vstv %s715
        %v717 = vsel %vm713, %v716, %v711
        %v718 = vsel %vm714, %v716, %v712
        %vm719 = vcmp.eq.s32.totalorder %v693, 4
        %vm720 = vcmp.eq.s32.totalorder %v694, 4
        %s721 = sld [smem:[#allocation2 + $0x4]]
        %v722 = vstv %s721
        %v723 = vsel %vm719, %v722, %v717
        %v724 = vsel %vm720, %v722, %v718
        %vm725 = vcmp.eq.s32.totalorder %v693, 5
        %vm726 = vcmp.eq.s32.totalorder %v694, 5
        %s727 = sld [smem:[#allocation2 + $0x5]]
        %v728 = vstv %s727
        %v729 = vsel %vm725, %v728, %v723
        %v730 = vsel %vm726, %v728, %v724
        %vm731 = vcmp.eq.s32.totalorder %v693, 6
        %vm732 = vcmp.eq.s32.totalorder %v694, 6
        %s733 = sld [smem:[#allocation2 + $0x6]]
        %v734 = vstv %s733
        %v735 = vsel %vm731, %v734, %v729
        %v736 = vsel %vm732, %v734, %v730
        %vm737 = vcmp.eq.s32.totalorder %v693, 7
        %vm738 = vcmp.eq.s32.totalorder %v694, 7
        %s739 = sld [smem:[#allocation2 + $0x7]]
        %v740 = vstv %s739
        %v741 = vsel %vm737, %v740, %v735
        %v742 = vsel %vm738, %v740, %v736
        %vm743 = vcmp.eq.s32.totalorder %v693, 8
        %vm744 = vcmp.eq.s32.totalorder %v694, 8
        %s745 = sld [smem:[#allocation2 + $0x8]]
        %v746 = vstv %s745
        %v747 = vsel %vm743, %v746, %v741
        %v748 = vsel %vm744, %v746, %v742
        %vm749 = vcmp.eq.s32.totalorder %v693, 9
        %vm750 = vcmp.eq.s32.totalorder %v694, 9
        %s751 = sld [smem:[#allocation2 + $0x9]]
        %v752 = vstv %s751
        %v753 = vsel %vm749, %v752, %v747
        %v754 = vsel %vm750, %v752, %v748
        %vm755 = vcmp.eq.s32.totalorder %v693, 10
        %vm756 = vcmp.eq.s32.totalorder %v694, 10
        %s757 = sld [smem:[#allocation2 + $0xa]]
        %v758 = vstv %s757
        %v759 = vsel %vm755, %v758, %v753
        %v760 = vsel %vm756, %v758, %v754
        %vm761 = vcmp.eq.s32.totalorder %v693, 11
        %vm762 = vcmp.eq.s32.totalorder %v694, 11
        %s763 = sld [smem:[#allocation2 + $0xb]]
        %v764 = vstv %s763
        %v765 = vsel %vm761, %v764, %v759
        %v766 = vsel %vm762, %v764, %v760
        %vm767 = vcmp.eq.s32.totalorder %v693, 12
        %vm768 = vcmp.eq.s32.totalorder %v694, 12
        %s769 = sld [smem:[#allocation2 + $0xc]]
        %v770 = vstv %s769
        %v771 = vsel %vm767, %v770, %v765
        %v772 = vsel %vm768, %v770, %v766
        %vm773 = vcmp.eq.s32.totalorder %v693, 13
        %vm774 = vcmp.eq.s32.totalorder %v694, 13
        %s775 = sld [smem:[#allocation2 + $0xd]]
        %v776 = vstv %s775
        %v777 = vsel %vm773, %v776, %v771
        %v778 = vsel %vm774, %v776, %v772
        %vm779 = vcmp.eq.s32.totalorder %v693, 14
        %vm780 = vcmp.eq.s32.totalorder %v694, 14
        %s781 = sld [smem:[#allocation2 + $0xe]]
        %v782 = vstv %s781
        %v783 = vsel %vm779, %v782, %v777
        %v784 = vsel %vm780, %v782, %v778
        %vm785 = vcmp.eq.s32.totalorder %v693, 15
        %vm786 = vcmp.eq.s32.totalorder %v694, 15
        %s787 = sld [smem:[#allocation2 + $0xf]]
        %v788 = vstv %s787
        %v789 = vsel %vm785, %v788, %v783
        %v790 = vsel %vm786, %v788, %v784
        %vm791 = vcmp.eq.s32.totalorder %v693, 16
        %vm792 = vcmp.eq.s32.totalorder %v694, 16
        %s793 = sld [smem:[#allocation2 + $0x10]]
        %v794 = vstv %s793
        %v795 = vsel %vm791, %v794, %v789
        %v796 = vsel %vm792, %v794, %v790
        %v797 = vmul.f32 %v409, 0.17677669
        %v798 = vmul.f32 %v414, 0.17677669
        %v799 = vmul.f32 %v496, 0.17677669
        %v800 = vmul.f32 %v501, 0.17677669
        %v801 = vmul.f32 %v583, 0.17677669
        %v802 = vmul.f32 %v588, 0.17677669
        %v803 = vmul.f32 %v670, 0.17677669
        %v804 = vmul.f32 %v675, 0.17677669
        %v805 = vadd.f32 %v797, %v795
        %v806 = vadd.f32 %v798, %v796
        %v807 = vadd.f32 %v799, %v795
        %v808 = vadd.f32 %v800, %v796
        %v809 = vadd.f32 %v801, %v795
        %v810 = vadd.f32 %v802, %v796
        %v811 = vadd.f32 %v803, %v795
        %v812 = vadd.f32 %v804, %v796
        %vm813 = vcmask 130048
        %v814 = vsel %vm813, %v805, -inf
        %815 = vmax.xlane.f32.xlu0 %v814
        %v816 = vpop.xlane.xlu0 %815
        %v817 = vsel %vm813, %v806, -inf
        %818 = vmax.xlane.f32.xlu0 %v817
        %v819 = vpop.xlane.xlu0 %818
        %v820 = vsel %vm813, %v807, -inf
        %821 = vmax.xlane.f32.xlu0 %v820
        %v822 = vpop.xlane.xlu0 %821
        %v823 = vsel %vm813, %v808, -inf
        %824 = vmax.xlane.f32.xlu0 %v823
        %v825 = vpop.xlane.xlu0 %824
        %v826 = vsel %vm813, %v809, -inf
        %827 = vmax.xlane.f32.xlu0 %v826
        %v828 = vpop.xlane.xlu0 %827
        %v829 = vsel %vm813, %v810, -inf
        %830 = vmax.xlane.f32.xlu0 %v829
        %v831 = vpop.xlane.xlu0 %830
        %v832 = vsel %vm813, %v811, -inf
        %833 = vmax.xlane.f32.xlu0 %v832
        %v834 = vpop.xlane.xlu0 %833
        %v835 = vsel %vm813, %v812, -inf
        %836 = vmax.xlane.f32.xlu0 %v835
        %v837 = vpop.xlane.xlu0 %836
        %v838 = vsub.f32 %v805, %v816
        %v839 = vsub.f32 %v806, %v819
        %v840 = vsub.f32 %v807, %v822
        %v841 = vsub.f32 %v808, %v825
        %v842 = vsub.f32 %v809, %v828
        %v843 = vsub.f32 %v810, %v831
        %v844 = vsub.f32 %v811, %v834
        %v845 = vsub.f32 %v812, %v837
        %v846 = vmul.f32 %v838, 1.442695
        %v847 = vpow.pop %v846
        %v848 = vmul.f32 %v839, 1.442695
        %v849 = vpow.pop %v848
        %v850 = vmul.f32 %v840, 1.442695
        %v851 = vpow.pop %v850
        %v852 = vmul.f32 %v841, 1.442695
        %v853 = vpow.pop %v852
        %v854 = vmul.f32 %v842, 1.442695
        %v855 = vpow.pop %v854
        %v856 = vmul.f32 %v843, 1.442695
        %v857 = vpow.pop %v856
        %v858 = vmul.f32 %v844, 1.442695
        %v859 = vpow.pop %v858
        %v860 = vmul.f32 %v845, 1.442695
        %v861 = vpow.pop %v860
        %v862 = vsel %vm813, %v847, 0.0
        %863 = vadd.xlane.f32.xlu0 %v862
        %v864 = vpop.xlane.xlu0 %863
        %v865 = vsel %vm813, %v849, 0.0
        %866 = vadd.xlane.f32.xlu0 %v865
        %v867 = vpop.xlane.xlu0 %866
        %v868 = vsel %vm813, %v851, 0.0
        %869 = vadd.xlane.f32.xlu0 %v868
        %v870 = vpop.xlane.xlu0 %869
        %v871 = vsel %vm813, %v853, 0.0
        %872 = vadd.xlane.f32.xlu0 %v871
        %v873 = vpop.xlane.xlu0 %872
        %v874 = vsel %vm813, %v855, 0.0
        %875 = vadd.xlane.f32.xlu0 %v874
        %v876 = vpop.xlane.xlu0 %875
        %v877 = vsel %vm813, %v857, 0.0
        %878 = vadd.xlane.f32.xlu0 %v877
        %v879 = vpop.xlane.xlu0 %878
        %v880 = vsel %vm813, %v859, 0.0
        %881 = vadd.xlane.f32.xlu0 %v880
        %v882 = vpop.xlane.xlu0 %881
        %v883 = vsel %vm813, %v861, 0.0
        %884 = vadd.xlane.f32.xlu0 %v883
        %v885 = vpop.xlane.xlu0 %884
        %v886 = vrcp.pop %v864
        %v887 = vrcp.pop %v867
        %v888 = vrcp.pop %v870
        %v889 = vrcp.pop %v873
        %v890 = vrcp.pop %v876
        %v891 = vrcp.pop %v879
        %v892 = vrcp.pop %v882
        %v893 = vrcp.pop %v885
        %v894 = vmul.f32 %v864, %v886
        %v895 = vmul.f32 %v867, %v887
        %v896 = vmul.f32 %v870, %v888
        %v897 = vmul.f32 %v873, %v889
        %v898 = vmul.f32 %v876, %v890
        %v899 = vmul.f32 %v879, %v891
        %v900 = vmul.f32 %v882, %v892
        %v901 = vmul.f32 %v885, %v893
        %v902 = vsub.f32 2.0, %v894
        %v903 = vsub.f32 2.0, %v895
        %v904 = vsub.f32 2.0, %v896
        %v905 = vsub.f32 2.0, %v897
        %v906 = vsub.f32 2.0, %v898
        %v907 = vsub.f32 2.0, %v899
        %v908 = vsub.f32 2.0, %v900
        %v909 = vsub.f32 2.0, %v901
        %v910 = vmul.f32 %v886, %v902
        %v911 = vmul.f32 %v887, %v903
        %v912 = vmul.f32 %v888, %v904
        %v913 = vmul.f32 %v889, %v905
        %v914 = vmul.f32 %v890, %v906
        %v915 = vmul.f32 %v891, %v907
        %v916 = vmul.f32 %v892, %v908
        %v917 = vmul.f32 %v893, %v909
        %v919 = vsel %vm813, %v847, 0
        %v922 = vsel %vm813, %v849, 0
        %924 = vmatprep.subr.mxu0 0.0
        %925 = vmatpush1.msra.mxu0 %v321
        %926 = vmatprep.subr.mxu0 0.0
        %927 = vmatpush1.msra.mxu0 %v322
        %928 = vmatprep.subr.mxu0 0.0
        %929 = vmatpush1.msra.mxu0 0.0
        %930 = vmatprep.subr.mxu0 0.0
        %931 = vmatpush1.msra.mxu0 0.0
        %932 = vmatprep.subr.mxu0 0.0
        %933 = vmatpush1.msra.mxu0 0.0
        %934 = vmatprep.subr.mxu0 0.0
        %935 = vmatpush1.msra.mxu0 0.0
        %936 = vmatprep.subr.mxu0 0.0
        %937 = vmatpush1.msra.mxu0 0.0
        %938 = vmatprep.subr.mxu0 0.0
        %939 = vmatpush1.msra.mxu0 0.0
        %940 = vmatprep.subr.mxu0 0.0
        %941 = vmatpush1.msra.mxu0 0.0
        %942 = vmatprep.subr.mxu0 0.0
        %943 = vmatpush1.msra.mxu0 0.0
        %944 = vmatprep.subr.mxu0 0.0
        %945 = vmatpush1.msra.mxu0 0.0
        %946 = vmatprep.subr.mxu0 0.0
        %947 = vmatpush1.msra.mxu0 0.0
        %948 = vmatprep.subr.mxu0 0.0
        %949 = vmatpush1.msra.mxu0 0.0
        %950 = vmatprep.subr.mxu0 0.0
        %951 = vmatpush1.msra.mxu0 0.0
        %952 = vmatprep.subr.mxu0 0.0
        %953 = vmatpush1.msra.mxu0 0.0
        %954 = vmatprep.subr.mxu0 0.0
        %955 = vmatpush1.msra.mxu0 0.0
        %956 = vmatprep.subr.mxu0 0.0
        %957 = vmatpush1.msra.mxu0 0.0
        %958 = vmatprep.subr.mxu0 0.0
        %959 = vmatpush1.msra.mxu0 0.0
        %960 = vmatprep.subr.mxu0 0.0
        %961 = vmatpush1.msra.mxu0 0.0
        %962 = vmatprep.subr.mxu0 0.0
        %963 = vmatpush1.msra.mxu0 0.0
        %964 = vmatprep.subr.mxu0 0.0
        %965 = vmatpush1.msra.mxu0 0.0
        %966 = vmatprep.subr.mxu0 0.0
        %967 = vmatpush1.msra.mxu0 0.0
        %968 = vmatprep.subr.mxu0 0.0
        %969 = vmatpush1.msra.mxu0 0.0
        %970 = vmatprep.subr.mxu0 0.0
        %971 = vmatpush1.msra.mxu0 0.0
        %972 = vmatprep.subr.mxu0 0.0
        %973 = vmatpush1.msra.mxu0 0.0
        %974 = vmatprep.subr.mxu0 0.0
        %975 = vmatpush1.msra.mxu0 0.0
        %976 = vmatprep.subr.mxu0 0.0
        %977 = vmatpush1.msra.mxu0 0.0
        %978 = vmatprep.subr.mxu0 0.0
        %979 = vmatpush1.msra.mxu0 0.0
        %980 = vmatprep.subr.mxu0 0.0
        %981 = vmatpush1.msra.mxu0 0.0
        %982 = vmatprep.subr.mxu0 0.0
        %983 = vmatpush1.msra.mxu0 0.0
        %984 = vmatprep.subr.mxu0 0.0
        %985 = vmatpush1.msra.mxu0 0.0
        %986 = vmatprep.subr.mxu0 0.0
        %987 = vmatpush1.msra.mxu0 0.0
        %988 = vmatprep.mubr.f32.mxu0 0.0
        %989 = vmatmul.mubr.f32.gmra.mrb[0].mxu0 %v919
        %v990 = vpop.f32.mrb[0].mxu0
        %v991 = vadd.f32 0.0, %v990
        %v992 = vpop.f32.mrb[0].mxu0
        %993 = vmatprep.mubr.f32.mxu0 0.0
        %994 = vmatmul.mubr.f32.gmra.mrb[0].mxu0 %v922
        %v995 = vpop.f32.mrb[0].mxu0
        %v996 = vadd.f32 0.0, %v995
        %v997 = vpop.f32.mrb[0].mxu0
        %998 = vdwg.mxu0
        %v1000 = vsel %vm813, %v851, 0
        %v1003 = vsel %vm813, %v853, 0
        %1005 = vmatprep.subr.mxu0 0.0
        %1006 = vmatpush1.msra.mxu0 %v323
        %1007 = vmatprep.subr.mxu0 0.0
        %1008 = vmatpush1.msra.mxu0 %v324
        %1009 = vmatprep.subr.mxu0 0.0
        %1010 = vmatpush1.msra.mxu0 0.0
        %1011 = vmatprep.subr.mxu0 0.0
        %1012 = vmatpush1.msra.mxu0 0.0
        %1013 = vmatprep.subr.mxu0 0.0
        %1014 = vmatpush1.msra.mxu0 0.0
        %1015 = vmatprep.subr.mxu0 0.0
        %1016 = vmatpush1.msra.mxu0 0.0
        %1017 = vmatprep.subr.mxu0 0.0
        %1018 = vmatpush1.msra.mxu0 0.0
        %1019 = vmatprep.subr.mxu0 0.0
        %1020 = vmatpush1.msra.mxu0 0.0
        %1021 = vmatprep.subr.mxu0 0.0
        %1022 = vmatpush1.msra.mxu0 0.0
        %1023 = vmatprep.subr.mxu0 0.0
        %1024 = vmatpush1.msra.mxu0 0.0
        %1025 = vmatprep.subr.mxu0 0.0
        %1026 = vmatpush1.msra.mxu0 0.0
        %1027 = vmatprep.subr.mxu0 0.0
        %1028 = vmatpush1.msra.mxu0 0.0
        %1029 = vmatprep.subr.mxu0 0.0
        %1030 = vmatpush1.msra.mxu0 0.0
        %1031 = vmatprep.subr.mxu0 0.0
        %1032 = vmatpush1.msra.mxu0 0.0
        %1033 = vmatprep.subr.mxu0 0.0
        %1034 = vmatpush1.msra.mxu0 0.0
        %1035 = vmatprep.subr.mxu0 0.0
        %1036 = vmatpush1.msra.mxu0 0.0
        %1037 = vmatprep.subr.mxu0 0.0
        %1038 = vmatpush1.msra.mxu0 0.0
        %1039 = vmatprep.subr.mxu0 0.0
        %1040 = vmatpush1.msra.mxu0 0.0
        %1041 = vmatprep.subr.mxu0 0.0
        %1042 = vmatpush1.msra.mxu0 0.0
        %1043 = vmatprep.subr.mxu0 0.0
        %1044 = vmatpush1.msra.mxu0 0.0
        %1045 = vmatprep.subr.mxu0 0.0
        %1046 = vmatpush1.msra.mxu0 0.0
        %1047 = vmatprep.subr.mxu0 0.0
        %1048 = vmatpush1.msra.mxu0 0.0
        %1049 = vmatprep.subr.mxu0 0.0
        %1050 = vmatpush1.msra.mxu0 0.0
        %1051 = vmatprep.subr.mxu0 0.0
        %1052 = vmatpush1.msra.mxu0 0.0
        %1053 = vmatprep.subr.mxu0 0.0
        %1054 = vmatpush1.msra.mxu0 0.0
        %1055 = vmatprep.subr.mxu0 0.0
        %1056 = vmatpush1.msra.mxu0 0.0
        %1057 = vmatprep.subr.mxu0 0.0
        %1058 = vmatpush1.msra.mxu0 0.0
        %1059 = vmatprep.subr.mxu0 0.0
        %1060 = vmatpush1.msra.mxu0 0.0
        %1061 = vmatprep.subr.mxu0 0.0
        %1062 = vmatpush1.msra.mxu0 0.0
        %1063 = vmatprep.subr.mxu0 0.0
        %1064 = vmatpush1.msra.mxu0 0.0
        %1065 = vmatprep.subr.mxu0 0.0
        %1066 = vmatpush1.msra.mxu0 0.0
        %1067 = vmatprep.subr.mxu0 0.0
        %1068 = vmatpush1.msra.mxu0 0.0
        %1069 = vmatprep.mubr.f32.mxu0 0.0
        %1070 = vmatmul.mubr.f32.gmra.mrb[0].mxu0 %v1000
        %v1071 = vpop.f32.mrb[0].mxu0
        %v1072 = vadd.f32 0.0, %v1071
        %v1073 = vpop.f32.mrb[0].mxu0
        %1074 = vmatprep.mubr.f32.mxu0 0.0
        %1075 = vmatmul.mubr.f32.gmra.mrb[0].mxu0 %v1003
        %v1076 = vpop.f32.mrb[0].mxu0
        %v1077 = vadd.f32 0.0, %v1076
        %v1078 = vpop.f32.mrb[0].mxu0
        %1079 = vdwg.mxu0
        %v1081 = vsel %vm813, %v855, 0
        %v1084 = vsel %vm813, %v857, 0
        %1086 = vmatprep.subr.mxu0 0.0
        %1087 = vmatpush1.msra.mxu0 %v325
        %1088 = vmatprep.subr.mxu0 0.0
        %1089 = vmatpush1.msra.mxu0 %v326
        %1090 = vmatprep.subr.mxu0 0.0
        %1091 = vmatpush1.msra.mxu0 0.0
        %1092 = vmatprep.subr.mxu0 0.0
        %1093 = vmatpush1.msra.mxu0 0.0
        %1094 = vmatprep.subr.mxu0 0.0
        %1095 = vmatpush1.msra.mxu0 0.0
        %1096 = vmatprep.subr.mxu0 0.0
        %1097 = vmatpush1.msra.mxu0 0.0
        %1098 = vmatprep.subr.mxu0 0.0
        %1099 = vmatpush1.msra.mxu0 0.0
        %1100 = vmatprep.subr.mxu0 0.0
        %1101 = vmatpush1.msra.mxu0 0.0
        %1102 = vmatprep.subr.mxu0 0.0
        %1103 = vmatpush1.msra.mxu0 0.0
        %1104 = vmatprep.subr.mxu0 0.0
        %1105 = vmatpush1.msra.mxu0 0.0
        %1106 = vmatprep.subr.mxu0 0.0
        %1107 = vmatpush1.msra.mxu0 0.0
        %1108 = vmatprep.subr.mxu0 0.0
        %1109 = vmatpush1.msra.mxu0 0.0
        %1110 = vmatprep.subr.mxu0 0.0
        %1111 = vmatpush1.msra.mxu0 0.0
        %1112 = vmatprep.subr.mxu0 0.0
        %1113 = vmatpush1.msra.mxu0 0.0
        %1114 = vmatprep.subr.mxu0 0.0
        %1115 = vmatpush1.msra.mxu0 0.0
        %1116 = vmatprep.subr.mxu0 0.0
        %1117 = vmatpush1.msra.mxu0 0.0
        %1118 = vmatprep.subr.mxu0 0.0
        %1119 = vmatpush1.msra.mxu0 0.0
        %1120 = vmatprep.subr.mxu0 0.0
        %1121 = vmatpush1.msra.mxu0 0.0
        %1122 = vmatprep.subr.mxu0 0.0
        %1123 = vmatpush1.msra.mxu0 0.0
        %1124 = vmatprep.subr.mxu0 0.0
        %1125 = vmatpush1.msra.mxu0 0.0
        %1126 = vmatprep.subr.mxu0 0.0
        %1127 = vmatpush1.msra.mxu0 0.0
        %1128 = vmatprep.subr.mxu0 0.0
        %1129 = vmatpush1.msra.mxu0 0.0
        %1130 = vmatprep.subr.mxu0 0.0
        %1131 = vmatpush1.msra.mxu0 0.0
        %1132 = vmatprep.subr.mxu0 0.0
        %1133 = vmatpush1.msra.mxu0 0.0
        %1134 = vmatprep.subr.mxu0 0.0
        %1135 = vmatpush1.msra.mxu0 0.0
        %1136 = vmatprep.subr.mxu0 0.0
        %1137 = vmatpush1.msra.mxu0 0.0
        %1138 = vmatprep.subr.mxu0 0.0
        %1139 = vmatpush1.msra.mxu0 0.0
        %1140 = vmatprep.subr.mxu0 0.0
        %1141 = vmatpush1.msra.mxu0 0.0
        %1142 = vmatprep.subr.mxu0 0.0
        %1143 = vmatpush1.msra.mxu0 0.0
        %1144 = vmatprep.subr.mxu0 0.0
        %1145 = vmatpush1.msra.mxu0 0.0
        %1146 = vmatprep.subr.mxu0 0.0
        %1147 = vmatpush1.msra.mxu0 0.0
        %1148 = vmatprep.subr.mxu0 0.0
        %1149 = vmatpush1.msra.mxu0 0.0
        %1150 = vmatprep.mubr.f32.mxu0 0.0
        %1151 = vmatmul.mubr.f32.gmra.mrb[0].mxu0 %v1081
        %v1152 = vpop.f32.mrb[0].mxu0
        %v1153 = vadd.f32 0.0, %v1152
        %v1154 = vpop.f32.mrb[0].mxu0
        %1155 = vmatprep.mubr.f32.mxu0 0.0
        %1156 = vmatmul.mubr.f32.gmra.mrb[0].mxu0 %v1084
        %v1157 = vpop.f32.mrb[0].mxu0
        %v1158 = vadd.f32 0.0, %v1157
        %v1159 = vpop.f32.mrb[0].mxu0
        %1160 = vdwg.mxu0
        %v1162 = vsel %vm813, %v859, 0
        %v1165 = vsel %vm813, %v861, 0
        %1167 = vmatprep.subr.mxu0 0.0
        %1168 = vmatpush1.msra.mxu0 %v327
        %1169 = vmatprep.subr.mxu0 0.0
        %1170 = vmatpush1.msra.mxu0 %v328
        %1171 = vmatprep.subr.mxu0 0.0
        %1172 = vmatpush1.msra.mxu0 0.0
        %1173 = vmatprep.subr.mxu0 0.0
        %1174 = vmatpush1.msra.mxu0 0.0
        %1175 = vmatprep.subr.mxu0 0.0
        %1176 = vmatpush1.msra.mxu0 0.0
        %1177 = vmatprep.subr.mxu0 0.0
        %1178 = vmatpush1.msra.mxu0 0.0
        %1179 = vmatprep.subr.mxu0 0.0
        %1180 = vmatpush1.msra.mxu0 0.0
        %1181 = vmatprep.subr.mxu0 0.0
        %1182 = vmatpush1.msra.mxu0 0.0
        %1183 = vmatprep.subr.mxu0 0.0
        %1184 = vmatpush1.msra.mxu0 0.0
        %1185 = vmatprep.subr.mxu0 0.0
        %1186 = vmatpush1.msra.mxu0 0.0
        %1187 = vmatprep.subr.mxu0 0.0
        %1188 = vmatpush1.msra.mxu0 0.0
        %1189 = vmatprep.subr.mxu0 0.0
        %1190 = vmatpush1.msra.mxu0 0.0
        %1191 = vmatprep.subr.mxu0 0.0
        %1192 = vmatpush1.msra.mxu0 0.0
        %1193 = vmatprep.subr.mxu0 0.0
        %1194 = vmatpush1.msra.mxu0 0.0
        %1195 = vmatprep.subr.mxu0 0.0
        %1196 = vmatpush1.msra.mxu0 0.0
        %1197 = vmatprep.subr.mxu0 0.0
        %1198 = vmatpush1.msra.mxu0 0.0
        %1199 = vmatprep.subr.mxu0 0.0
        %1200 = vmatpush1.msra.mxu0 0.0
        %1201 = vmatprep.subr.mxu0 0.0
        %1202 = vmatpush1.msra.mxu0 0.0
        %1203 = vmatprep.subr.mxu0 0.0
        %1204 = vmatpush1.msra.mxu0 0.0
        %1205 = vmatprep.subr.mxu0 0.0
        %1206 = vmatpush1.msra.mxu0 0.0
        %1207 = vmatprep.subr.mxu0 0.0
        %1208 = vmatpush1.msra.mxu0 0.0
        %1209 = vmatprep.subr.mxu0 0.0
        %1210 = vmatpush1.msra.mxu0 0.0
        %1211 = vmatprep.subr.mxu0 0.0
        %1212 = vmatpush1.msra.mxu0 0.0
        %1213 = vmatprep.subr.mxu0 0.0
        %1214 = vmatpush1.msra.mxu0 0.0
        %1215 = vmatprep.subr.mxu0 0.0
        %1216 = vmatpush1.msra.mxu0 0.0
        %1217 = vmatprep.subr.mxu0 0.0
        %1218 = vmatpush1.msra.mxu0 0.0
        %1219 = vmatprep.subr.mxu0 0.0
        %1220 = vmatpush1.msra.mxu0 0.0
        %1221 = vmatprep.subr.mxu0 0.0
        %1222 = vmatpush1.msra.mxu0 0.0
        %1223 = vmatprep.subr.mxu0 0.0
        %1224 = vmatpush1.msra.mxu0 0.0
        %1225 = vmatprep.subr.mxu0 0.0
        %1226 = vmatpush1.msra.mxu0 0.0
        %1227 = vmatprep.subr.mxu0 0.0
        %1228 = vmatpush1.msra.mxu0 0.0
        %1229 = vmatprep.subr.mxu0 0.0
        %1230 = vmatpush1.msra.mxu0 0.0
        %1231 = vmatprep.mubr.f32.mxu0 0.0
        %1232 = vmatmul.mubr.f32.gmra.mrb[0].mxu0 %v1162
        %v1233 = vpop.f32.mrb[0].mxu0
        %v1234 = vadd.f32 0.0, %v1233
        %v1235 = vpop.f32.mrb[0].mxu0
        %1236 = vmatprep.mubr.f32.mxu0 0.0
        %1237 = vmatmul.mubr.f32.gmra.mrb[0].mxu0 %v1165
        %v1238 = vpop.f32.mrb[0].mxu0
        %v1239 = vadd.f32 0.0, %v1238
        %v1240 = vpop.f32.mrb[0].mxu0
        %1241 = vdwg.mxu0
        %v1242 = vmul.f32 %v991, %v910
        %v1243 = vmul.f32 %v996, %v911
        %v1244 = vmul.f32 %v1072, %v912
        %v1245 = vmul.f32 %v1077, %v913
        %v1246 = vmul.f32 %v1153, %v914
        %v1247 = vmul.f32 %v1158, %v915
        %v1248 = vmul.f32 %v1234, %v916
        %v1249 = vmul.f32 %v1239, %v917
        %1252 = vrot.lane.b32.xlu0 %v1244, 32
        %v1253 = vpop.permute.xlu0 %1252
        %1254 = vrot.lane.b32.xlu0 %v1245, 32
        %v1255 = vpop.permute.xlu0 %1254
        %1260 = vrot.lane.b32.xlu0 %v1246, 64
        %v1261 = vpop.permute.xlu0 %1260
        %1262 = vrot.lane.b32.xlu0 %v1247, 64
        %v1263 = vpop.permute.xlu0 %1262
        %1268 = vrot.lane.b32.xlu0 %v1248, 96
        %v1269 = vpop.permute.xlu0 %1268
        %1270 = vrot.lane.b32.xlu0 %v1249, 96
        %v1271 = vpop.permute.xlu0 %1270
        %v1274 = vsel %vm329, %v1242, %v1253
        %v1275 = vsel %vm329, %v1243, %v1255
        %vm1276 = vcmask 523264
        %v1277 = vsel %vm1276, %v1274, %v1261
        %v1278 = vsel %vm1276, %v1275, %v1263
        %vm1279 = vcmask 785408
        %v1280 = vsel %vm1279, %v1277, %v1269
        %v1281 = vsel %vm1279, %v1278, %v1271
        %1282 = vst [vmem:[%s304] sm:$0xff] %v1280
        %1283 = vst [vmem:[%s304 + $0x8] sm:$0xff] %v1281
        %s1284 = sand.u32 %s132, 1
        %s1285 = scalar_lea.sflag [#allocation4], %s1284
        %s1286 = sand.u32 %s132, 1
        %s1287 = smul.addr %s1286, 16
        %s1288 = scalar_lea.vmem [#allocation10], %s1287
        // Predicated region
        $region53: #{tpu_custom_call.1} parent=35 // pred_check
          %p1289 = pneg %p142
        $region54: #{tpu_custom_call.1} parent=35 // pred_check_branch
          %1291 = sbr.rel (%p1289) target = $region56
        $region55: #{tpu_custom_call.1} parent=35 // pred_region
          %s1293 = ssub.s32 256, 256
          %1294 = vsyncadd %s1285, %s1293
          %s1295 = smul.addr %s25, 2
          %s1296 = smul.addr %s1295, 128
          %s1297 = scalar_lea.hbm %s4, %s1296
          %s1298 = sshll.u32 %s1288, 4
          %s1299 = int_to_ptr.vmem [resolvable:$true] %s1298
          %1304 = dma.vmem_to_hbm [thread:$0]  %s1299, 256, %s1297, %s1285, 128, 128, 8
        $region56: #{tpu_custom_call.1} parent=35 // pred_fallthru
          _
      $region36: #{tpu_custom_call.1} parent=5 // pred_fallthru
        _
      %p1305 = scmp.le.s32.totalorder 2, %s20
      // Predicated region
      $region57: #{tpu_custom_call.1} parent=5 // pred_check
        %p1306 = pneg %p1305
      $region58: #{tpu_custom_call.1} parent=5 // pred_check_branch
        %1308 = sbr.rel (%p1306) target = $region60
      $region59: #{tpu_custom_call.1} parent=5 // pred_region
        %s1309 = ssub.s32 %s20, 2
        // Predicated region
        $region61: #{tpu_custom_call.1} parent=59 // pred_check
          %p1310 = pneg %p148
        $region62: #{tpu_custom_call.1} parent=59 // pred_check_branch
          %1312 = sbr.rel (%p1310) target = $region64
        $region63: #{tpu_custom_call.1} parent=59 // pred_region
          %s1313 = sand.u32 %s133, 1
          %s1314 = scalar_lea.sflag [#allocation4], %s1313
          %s1315 = sand.u32 %s133, 1
          %s1316 = smul.addr %s1315, 16
          %s1317 = scalar_lea.vmem [#allocation10], %s1316
          %1318 = dma.done %s1314, 256
        $region64: #{tpu_custom_call.1} parent=59 // pred_fallthru
          _
      $region60: #{tpu_custom_call.1} parent=5 // pred_fallthru
        _
    $region6: #{tpu_custom_call.1} parent=1 // loop_footer
      %s24 = sadd.s32 1, %s20
    $region7: #{tpu_custom_call.1} parent=1 // loop_footer_branch
      %19 = sbr.rel target = $region3
    $region8: #{tpu_custom_call.1} parent=1 // loop_exit
      _
    %1319 = vsyncpa [#allocation3], 1
    %s1320 = scalar_lea.sflag [#allocation3], 1
    %1321 = vsyncpa %s1320, 1
    %1322 = vsyncpa [#allocation8], 1
    %s1323 = scalar_lea.sflag [#allocation8], 1
    %1324 = vsyncpa %s1323, 1
    %1325 = vsyncpa [#allocation4], 1
    %s1326 = scalar_lea.sflag [#allocation4], 1
    %1327 = vsyncpa %s1326, 1
    %1328 = vsyncpa [#allocation5], 1
    %s1329 = scalar_lea.sflag [#allocation5], 1
    %1330 = vsyncpa %s1329, 1

</llo_original>
